<compile_context>
chip_gen: v5e
topology: v5e:2x2
jax: 0.10.0
libtpu: 0.0.40
codegen_flags: <defaults>
</compile_context>

<pallas_src>
import functools

import jax
import jax.numpy as jnp
import numpy as np
from jax import lax
from jax.experimental import pallas as pl
from jax.experimental.pallas import tpu as pltpu


# ----------------------------- kernel -------------------------------------- #

def _int_feature_kernel(feat_ref, table_ref, out_ref, *, in_dim, pack, merger):
    """One batch tile: gather-by-one-hot-matmul + merge, written lane-dense.

    feat_ref : (TBp, pack*in_dim) int32   -- packed feature tile
    table_ref: (V, D)                     -- VMEM-resident embedding table
    out_ref  : (TBp, pack*D)              -- sum / mean
               (TBp, pack*in_dim*D)       -- concat
    """
    tbp = feat_ref.shape[0]
    v, _ = table_ref.shape

    feat = feat_ref[...]                                    # (TBp, pack*in_dim)
    table = table_ref[...]                                  # (V, D)
    lane_iota = lax.broadcasted_iota(jnp.int32, (tbp, v), 1)

    def one_hot(col):
        # (TBp, V) one-hot of feature column `col`.
        # NOTE: out-of-range indices yield an all-zero row (torch would raise);
        # padding_idx rows are zero in the table so they contribute zero anyway.
        return (feat[:, col:col + 1] == lane_iota).astype(table.dtype)

    pieces = []
    if merger == "concat":
        # One small MXU matmul per (packed) slot; lanes land in final concat order.
        for c in range(pack * in_dim):
            pieces.append(
                jnp.dot(one_hot(c), table, preferred_element_type=jnp.float32))
    else:
        scale = (1.0 / in_dim) if merger == "mean" else None
        for k in range(pack):
            counts = one_hot(k * in_dim)
            for i in range(1, in_dim):
                counts = counts + one_hot(k * in_dim + i)
            acc = jnp.dot(counts, table, preferred_element_type=jnp.float32)
            if scale is not None:
                acc = acc * scale          # exact for power-of-two in_dim
            pieces.append(acc)

    out = pieces[0] if len(pieces) == 1 else jnp.concatenate(pieces, axis=-1)
    out_ref[...] = out.astype(out_ref.dtype)


# ----------------------------- wrapper ------------------------------------- #

def _pick_pack(row_width, b):
    """Smallest power-of-two pack with pack*row_width >= 128 lanes, dividing b."""
    pack = 1
    while pack * row_width < 128 and b % (pack * 2) == 0:
        pack *= 2
    return pack


def _pick_block_rows(bp, target):
    """Largest divisor of bp that is a multiple of 8 and <= target (else bp)."""
    for r in range(min(bp, max(target, 1)), 0, -1):
        if bp % r == 0 and r % 8 == 0:
            return r
    return bp  # block == full dim is always legal


def int_feature_column_forward(feature, table, *, merger, block_rows=512):
    """JAX/Pallas equivalent of IntFeatureColumn.forward."""
    assert feature.ndim == 2, "feature must be [batch, in_dim]"
    b, in_dim = feature.shape
    v, d = table.shape
    feature = feature.astype(jnp.int32)
    out_dtype = table.dtype

    if merger in ("sum", "mean"):
        row_width = d
    elif merger == "concat":
        row_width = in_dim * d
    else:
        raise ValueError(f"unknown merger: {merger}")

    # Lane-dense packing: fold `pack` consecutive batch rows into one output row
    # so each stored row is >= 128 f32 wide (unmasked full-width stores).
    pack = _pick_pack(row_width, b)
    bp = b // pack
    cols = pack * in_dim
    out_cols = pack * row_width
    feat_packed = feature.reshape(bp, cols)            # free, contiguous

    # Batch tiling: ~block_rows original rows per grid step.
    tbp = _pick_block_rows(bp, max(8, block_rows // pack))
    grid = (bp // tbp,)

    kernel = functools.partial(
        _int_feature_kernel, in_dim=in_dim, pack=pack, merger=merger)

    out = pl.pallas_call(
        kernel,
        out_shape=jax.ShapeDtypeStruct((bp, out_cols), out_dtype),
        grid_spec=pltpu.PrefetchScalarGridSpec(
            num_scalar_prefetch=0,
            grid=grid,
            in_specs=[
                # Feature tile: one (TBp, pack*in_dim) int32 block per step.
                pl.BlockSpec((tbp, cols), lambda i: (i, 0)),
                # Embedding table: constant index_map -> VMEM-resident, no re-DMA.
                pl.BlockSpec((v, d), lambda i: (0, 0)),
            ],
            out_specs=pl.BlockSpec((tbp, out_cols), lambda i: (i, 0)),
        ),
        compiler_params=pltpu.CompilerParams(
            dimension_semantics=("parallel",)),
    )(feat_packed, table)

    # Free contiguous reshape back to the module's output layout.
    return out.reshape(b, row_width)


# ----------------------------- main ---------------------------------------- #

if __name__ == "__main__":
    # Module config (IntFeatureColumn):
    #   fea_space_size (V) = 32, in_dim = 4, out_dim (embedding_dim D) = 8,
    #   padding_idx = 0, merger in {"sum", "mean", "concat"}.
    # Batch 256 so the batch-tiled grid actually has multiple steps.
    B, IN_DIM, V, D, PADDING_IDX = 256, 4, 32, 8, 0

    key = jax.random.PRNGKey(0)
    k_tab, k_idx = jax.random.split(key)

    # Deterministic Embedding weight (~ N(0,1)) with padding_idx row zeroed,
    # as torch.nn.Embedding(padding_idx=...) does.
    table = jax.random.normal(k_tab, (V, D), dtype=jnp.float32)
    table = table.at[PADDING_IDX].set(0.0)

    # Deterministic integer feature [B, IN_DIM] in [0, V).
    feature = jax.random.randint(k_idx, (B, IN_DIM), 0, V, dtype=jnp.int32)

    # Pure-JAX reference of IntFeatureColumn.forward.
    emb = jnp.take(table, feature, axis=0)               # [B, IN_DIM, D]
    refs = {
        "sum": emb.sum(axis=-2),
        "mean": emb.mean(axis=-2),
        "concat": emb.reshape(B, IN_DIM * D),
    }

    ok = True
    for merger in ("sum", "mean", "concat"):
        out = jax.block_until_ready(
            int_feature_column_forward(feature, table, merger=merger,
                                       block_rows=128))
        ref = refs[merger]
        if out.shape != ref.shape:
            ok = False
            print(f"shape mismatch for merger={merger}: {out.shape} vs {ref.shape}")
        elif not np.allclose(np.asarray(out), np.asarray(ref),
                             rtol=1e-5, atol=1e-5):
            ok = False
            print(f"value mismatch for merger={merger}")

    if ok:
        print("KERNEL_OK")
</pallas_src>

<mosaic_0001>
module attributes {stable_mosaic.version = 11 : i64} {
  func.func @_int_feature_kernel(%arg0: i32, %arg1: memref<8x64xi32, #tpu.memory_space<vmem>>, %arg2: memref<32x8xf32, #tpu.memory_space<vmem>>, %arg3: memref<8x128xf32, #tpu.memory_space<vmem>>) attributes {dimension_semantics = [#tpu.dimension_semantics<parallel>], iteration_bounds = array<i64: 2>, scalar_prefetch = 0 : i64, scratch_operands = 0 : i64, tpu.core_type = #tpu.core_type<tc>, window_params = [{transform_indices = @transform_0, window_bounds = array<i64: 8, 64>}, {pipeline_mode = #tpu.pipeline_mode<synchronous>, transform_indices = @transform_1, window_bounds = array<i64: 32, 8>}, {transform_indices = @transform_2, window_bounds = array<i64: 8, 128>}]} {
    %c0 = arith.constant 0 : index
    %c0_0 = arith.constant 0 : index
    %0 = vector.load %arg1[%c0, %c0_0] : memref<8x64xi32, #tpu.memory_space<vmem>>, vector<8x64xi32>
    %c0_1 = arith.constant 0 : index
    %c0_2 = arith.constant 0 : index
    %1 = vector.load %arg2[%c0_1, %c0_2] : memref<32x8xf32, #tpu.memory_space<vmem>>, vector<32x8xf32>
    %2 = tpu.iota {dimensions = array<i32: 1>} : vector<8x32xi32>
    %3 = vector.extract_strided_slice %0 {offsets = [0, 0], sizes = [8, 1], strides = [1, 1]} : vector<8x64xi32> to vector<8x1xi32>
    %4 = vector.broadcast %3 : vector<8x1xi32> to vector<8x32xi32>
    %5 = arith.cmpi eq, %4, %2 : vector<8x32xi32>
    %6 = arith.extui %5 : vector<8x32xi1> to vector<8x32xi32>
    %7 = arith.sitofp %6 : vector<8x32xi32> to vector<8x32xf32>
    %8 = vector.extract_strided_slice %0 {offsets = [0, 1], sizes = [8, 1], strides = [1, 1]} : vector<8x64xi32> to vector<8x1xi32>
    %9 = vector.broadcast %8 : vector<8x1xi32> to vector<8x32xi32>
    %10 = arith.cmpi eq, %9, %2 : vector<8x32xi32>
    %11 = arith.extui %10 : vector<8x32xi1> to vector<8x32xi32>
    %12 = arith.sitofp %11 : vector<8x32xi32> to vector<8x32xf32>
    %13 = arith.addf %7, %12 : vector<8x32xf32>
    %14 = vector.extract_strided_slice %0 {offsets = [0, 2], sizes = [8, 1], strides = [1, 1]} : vector<8x64xi32> to vector<8x1xi32>
    %15 = vector.broadcast %14 : vector<8x1xi32> to vector<8x32xi32>
    %16 = arith.cmpi eq, %15, %2 : vector<8x32xi32>
    %17 = arith.extui %16 : vector<8x32xi1> to vector<8x32xi32>
    %18 = arith.sitofp %17 : vector<8x32xi32> to vector<8x32xf32>
    %19 = arith.addf %13, %18 : vector<8x32xf32>
    %20 = vector.extract_strided_slice %0 {offsets = [0, 3], sizes = [8, 1], strides = [1, 1]} : vector<8x64xi32> to vector<8x1xi32>
    %21 = vector.broadcast %20 : vector<8x1xi32> to vector<8x32xi32>
    %22 = arith.cmpi eq, %21, %2 : vector<8x32xi32>
    %23 = arith.extui %22 : vector<8x32xi1> to vector<8x32xi32>
    %24 = arith.sitofp %23 : vector<8x32xi32> to vector<8x32xf32>
    %25 = arith.addf %19, %24 : vector<8x32xf32>
    %cst = arith.constant dense<0.000000e+00> : vector<8x8xf32>
    %26 = tpu.matmul %25, %1, %cst {dimension_numbers = #tpu.dot_dimension_numbers<[1], [0], [0], [1], [0, 0, 1, 1], [], []>} : vector<8x32xf32>, vector<32x8xf32>, vector<8x8xf32> -> vector<8x8xf32>
    %27 = vector.extract_strided_slice %0 {offsets = [0, 4], sizes = [8, 1], strides = [1, 1]} : vector<8x64xi32> to vector<8x1xi32>
    %28 = vector.broadcast %27 : vector<8x1xi32> to vector<8x32xi32>
    %29 = arith.cmpi eq, %28, %2 : vector<8x32xi32>
    %30 = arith.extui %29 : vector<8x32xi1> to vector<8x32xi32>
    %31 = arith.sitofp %30 : vector<8x32xi32> to vector<8x32xf32>
    %32 = vector.extract_strided_slice %0 {offsets = [0, 5], sizes = [8, 1], strides = [1, 1]} : vector<8x64xi32> to vector<8x1xi32>
    %33 = vector.broadcast %32 : vector<8x1xi32> to vector<8x32xi32>
    %34 = arith.cmpi eq, %33, %2 : vector<8x32xi32>
    %35 = arith.extui %34 : vector<8x32xi1> to vector<8x32xi32>
    %36 = arith.sitofp %35 : vector<8x32xi32> to vector<8x32xf32>
    %37 = arith.addf %31, %36 : vector<8x32xf32>
    %38 = vector.extract_strided_slice %0 {offsets = [0, 6], sizes = [8, 1], strides = [1, 1]} : vector<8x64xi32> to vector<8x1xi32>
    %39 = vector.broadcast %38 : vector<8x1xi32> to vector<8x32xi32>
    %40 = arith.cmpi eq, %39, %2 : vector<8x32xi32>
    %41 = arith.extui %40 : vector<8x32xi1> to vector<8x32xi32>
    %42 = arith.sitofp %41 : vector<8x32xi32> to vector<8x32xf32>
    %43 = arith.addf %37, %42 : vector<8x32xf32>
    %44 = vector.extract_strided_slice %0 {offsets = [0, 7], sizes = [8, 1], strides = [1, 1]} : vector<8x64xi32> to vector<8x1xi32>
    %45 = vector.broadcast %44 : vector<8x1xi32> to vector<8x32xi32>
    %46 = arith.cmpi eq, %45, %2 : vector<8x32xi32>
    %47 = arith.extui %46 : vector<8x32xi1> to vector<8x32xi32>
    %48 = arith.sitofp %47 : vector<8x32xi32> to vector<8x32xf32>
    %49 = arith.addf %43, %48 : vector<8x32xf32>
    %cst_3 = arith.constant dense<0.000000e+00> : vector<8x8xf32>
    %50 = tpu.matmul %49, %1, %cst_3 {dimension_numbers = #tpu.dot_dimension_numbers<[1], [0], [0], [1], [0, 0, 1, 1], [], []>} : vector<8x32xf32>, vector<32x8xf32>, vector<8x8xf32> -> vector<8x8xf32>
    %51 = vector.extract_strided_slice %0 {offsets = [0, 8], sizes = [8, 1], strides = [1, 1]} : vector<8x64xi32> to vector<8x1xi32>
    %52 = vector.broadcast %51 : vector<8x1xi32> to vector<8x32xi32>
    %53 = arith.cmpi eq, %52, %2 : vector<8x32xi32>
    %54 = arith.extui %53 : vector<8x32xi1> to vector<8x32xi32>
    %55 = arith.sitofp %54 : vector<8x32xi32> to vector<8x32xf32>
    %56 = vector.extract_strided_slice %0 {offsets = [0, 9], sizes = [8, 1], strides = [1, 1]} : vector<8x64xi32> to vector<8x1xi32>
    %57 = vector.broadcast %56 : vector<8x1xi32> to vector<8x32xi32>
    %58 = arith.cmpi eq, %57, %2 : vector<8x32xi32>
    %59 = arith.extui %58 : vector<8x32xi1> to vector<8x32xi32>
    %60 = arith.sitofp %59 : vector<8x32xi32> to vector<8x32xf32>
    %61 = arith.addf %55, %60 : vector<8x32xf32>
    %62 = vector.extract_strided_slice %0 {offsets = [0, 10], sizes = [8, 1], strides = [1, 1]} : vector<8x64xi32> to vector<8x1xi32>
    %63 = vector.broadcast %62 : vector<8x1xi32> to vector<8x32xi32>
    %64 = arith.cmpi eq, %63, %2 : vector<8x32xi32>
    %65 = arith.extui %64 : vector<8x32xi1> to vector<8x32xi32>
    %66 = arith.sitofp %65 : vector<8x32xi32> to vector<8x32xf32>
    %67 = arith.addf %61, %66 : vector<8x32xf32>
    %68 = vector.extract_strided_slice %0 {offsets = [0, 11], sizes = [8, 1], strides = [1, 1]} : vector<8x64xi32> to vector<8x1xi32>
    %69 = vector.broadcast %68 : vector<8x1xi32> to vector<8x32xi32>
    %70 = arith.cmpi eq, %69, %2 : vector<8x32xi32>
    %71 = arith.extui %70 : vector<8x32xi1> to vector<8x32xi32>
    %72 = arith.sitofp %71 : vector<8x32xi32> to vector<8x32xf32>
    %73 = arith.addf %67, %72 : vector<8x32xf32>
    %cst_4 = arith.constant dense<0.000000e+00> : vector<8x8xf32>
    %74 = tpu.matmul %73, %1, %cst_4 {dimension_numbers = #tpu.dot_dimension_numbers<[1], [0], [0], [1], [0, 0, 1, 1], [], []>} : vector<8x32xf32>, vector<32x8xf32>, vector<8x8xf32> -> vector<8x8xf32>
    %75 = vector.extract_strided_slice %0 {offsets = [0, 12], sizes = [8, 1], strides = [1, 1]} : vector<8x64xi32> to vector<8x1xi32>
    %76 = vector.broadcast %75 : vector<8x1xi32> to vector<8x32xi32>
    %77 = arith.cmpi eq, %76, %2 : vector<8x32xi32>
    %78 = arith.extui %77 : vector<8x32xi1> to vector<8x32xi32>
    %79 = arith.sitofp %78 : vector<8x32xi32> to vector<8x32xf32>
    %80 = vector.extract_strided_slice %0 {offsets = [0, 13], sizes = [8, 1], strides = [1, 1]} : vector<8x64xi32> to vector<8x1xi32>
    %81 = vector.broadcast %80 : vector<8x1xi32> to vector<8x32xi32>
    %82 = arith.cmpi eq, %81, %2 : vector<8x32xi32>
    %83 = arith.extui %82 : vector<8x32xi1> to vector<8x32xi32>
    %84 = arith.sitofp %83 : vector<8x32xi32> to vector<8x32xf32>
    %85 = arith.addf %79, %84 : vector<8x32xf32>
    %86 = vector.extract_strided_slice %0 {offsets = [0, 14], sizes = [8, 1], strides = [1, 1]} : vector<8x64xi32> to vector<8x1xi32>
    %87 = vector.broadcast %86 : vector<8x1xi32> to vector<8x32xi32>
    %88 = arith.cmpi eq, %87, %2 : vector<8x32xi32>
    %89 = arith.extui %88 : vector<8x32xi1> to vector<8x32xi32>
    %90 = arith.sitofp %89 : vector<8x32xi32> to vector<8x32xf32>
    %91 = arith.addf %85, %90 : vector<8x32xf32>
    %92 = vector.extract_strided_slice %0 {offsets = [0, 15], sizes = [8, 1], strides = [1, 1]} : vector<8x64xi32> to vector<8x1xi32>
    %93 = vector.broadcast %92 : vector<8x1xi32> to vector<8x32xi32>
    %94 = arith.cmpi eq, %93, %2 : vector<8x32xi32>
    %95 = arith.extui %94 : vector<8x32xi1> to vector<8x32xi32>
    %96 = arith.sitofp %95 : vector<8x32xi32> to vector<8x32xf32>
    %97 = arith.addf %91, %96 : vector<8x32xf32>
    %cst_5 = arith.constant dense<0.000000e+00> : vector<8x8xf32>
    %98 = tpu.matmul %97, %1, %cst_5 {dimension_numbers = #tpu.dot_dimension_numbers<[1], [0], [0], [1], [0, 0, 1, 1], [], []>} : vector<8x32xf32>, vector<32x8xf32>, vector<8x8xf32> -> vector<8x8xf32>
    %99 = vector.extract_strided_slice %0 {offsets = [0, 16], sizes = [8, 1], strides = [1, 1]} : vector<8x64xi32> to vector<8x1xi32>
    %100 = vector.broadcast %99 : vector<8x1xi32> to vector<8x32xi32>
    %101 = arith.cmpi eq, %100, %2 : vector<8x32xi32>
    %102 = arith.extui %101 : vector<8x32xi1> to vector<8x32xi32>
    %103 = arith.sitofp %102 : vector<8x32xi32> to vector<8x32xf32>
    %104 = vector.extract_strided_slice %0 {offsets = [0, 17], sizes = [8, 1], strides = [1, 1]} : vector<8x64xi32> to vector<8x1xi32>
    %105 = vector.broadcast %104 : vector<8x1xi32> to vector<8x32xi32>
    %106 = arith.cmpi eq, %105, %2 : vector<8x32xi32>
    %107 = arith.extui %106 : vector<8x32xi1> to vector<8x32xi32>
    %108 = arith.sitofp %107 : vector<8x32xi32> to vector<8x32xf32>
    %109 = arith.addf %103, %108 : vector<8x32xf32>
    %110 = vector.extract_strided_slice %0 {offsets = [0, 18], sizes = [8, 1], strides = [1, 1]} : vector<8x64xi32> to vector<8x1xi32>
    %111 = vector.broadcast %110 : vector<8x1xi32> to vector<8x32xi32>
    %112 = arith.cmpi eq, %111, %2 : vector<8x32xi32>
    %113 = arith.extui %112 : vector<8x32xi1> to vector<8x32xi32>
    %114 = arith.sitofp %113 : vector<8x32xi32> to vector<8x32xf32>
    %115 = arith.addf %109, %114 : vector<8x32xf32>
    %116 = vector.extract_strided_slice %0 {offsets = [0, 19], sizes = [8, 1], strides = [1, 1]} : vector<8x64xi32> to vector<8x1xi32>
    %117 = vector.broadcast %116 : vector<8x1xi32> to vector<8x32xi32>
    %118 = arith.cmpi eq, %117, %2 : vector<8x32xi32>
    %119 = arith.extui %118 : vector<8x32xi1> to vector<8x32xi32>
    %120 = arith.sitofp %119 : vector<8x32xi32> to vector<8x32xf32>
    %121 = arith.addf %115, %120 : vector<8x32xf32>
    %cst_6 = arith.constant dense<0.000000e+00> : vector<8x8xf32>
    %122 = tpu.matmul %121, %1, %cst_6 {dimension_numbers = #tpu.dot_dimension_numbers<[1], [0], [0], [1], [0, 0, 1, 1], [], []>} : vector<8x32xf32>, vector<32x8xf32>, vector<8x8xf32> -> vector<8x8xf32>
    %123 = vector.extract_strided_slice %0 {offsets = [0, 20], sizes = [8, 1], strides = [1, 1]} : vector<8x64xi32> to vector<8x1xi32>
    %124 = vector.broadcast %123 : vector<8x1xi32> to vector<8x32xi32>
    %125 = arith.cmpi eq, %124, %2 : vector<8x32xi32>
    %126 = arith.extui %125 : vector<8x32xi1> to vector<8x32xi32>
    %127 = arith.sitofp %126 : vector<8x32xi32> to vector<8x32xf32>
    %128 = vector.extract_strided_slice %0 {offsets = [0, 21], sizes = [8, 1], strides = [1, 1]} : vector<8x64xi32> to vector<8x1xi32>
    %129 = vector.broadcast %128 : vector<8x1xi32> to vector<8x32xi32>
    %130 = arith.cmpi eq, %129, %2 : vector<8x32xi32>
    %131 = arith.extui %130 : vector<8x32xi1> to vector<8x32xi32>
    %132 = arith.sitofp %131 : vector<8x32xi32> to vector<8x32xf32>
    %133 = arith.addf %127, %132 : vector<8x32xf32>
    %134 = vector.extract_strided_slice %0 {offsets = [0, 22], sizes = [8, 1], strides = [1, 1]} : vector<8x64xi32> to vector<8x1xi32>
    %135 = vector.broadcast %134 : vector<8x1xi32> to vector<8x32xi32>
    %136 = arith.cmpi eq, %135, %2 : vector<8x32xi32>
    %137 = arith.extui %136 : vector<8x32xi1> to vector<8x32xi32>
    %138 = arith.sitofp %137 : vector<8x32xi32> to vector<8x32xf32>
    %139 = arith.addf %133, %138 : vector<8x32xf32>
    %140 = vector.extract_strided_slice %0 {offsets = [0, 23], sizes = [8, 1], strides = [1, 1]} : vector<8x64xi32> to vector<8x1xi32>
    %141 = vector.broadcast %140 : vector<8x1xi32> to vector<8x32xi32>
    %142 = arith.cmpi eq, %141, %2 : vector<8x32xi32>
    %143 = arith.extui %142 : vector<8x32xi1> to vector<8x32xi32>
    %144 = arith.sitofp %143 : vector<8x32xi32> to vector<8x32xf32>
    %145 = arith.addf %139, %144 : vector<8x32xf32>
    %cst_7 = arith.constant dense<0.000000e+00> : vector<8x8xf32>
    %146 = tpu.matmul %145, %1, %cst_7 {dimension_numbers = #tpu.dot_dimension_numbers<[1], [0], [0], [1], [0, 0, 1, 1], [], []>} : vector<8x32xf32>, vector<32x8xf32>, vector<8x8xf32> -> vector<8x8xf32>
    %147 = vector.extract_strided_slice %0 {offsets = [0, 24], sizes = [8, 1], strides = [1, 1]} : vector<8x64xi32> to vector<8x1xi32>
    %148 = vector.broadcast %147 : vector<8x1xi32> to vector<8x32xi32>
    %149 = arith.cmpi eq, %148, %2 : vector<8x32xi32>
    %150 = arith.extui %149 : vector<8x32xi1> to vector<8x32xi32>
    %151 = arith.sitofp %150 : vector<8x32xi32> to vector<8x32xf32>
    %152 = vector.extract_strided_slice %0 {offsets = [0, 25], sizes = [8, 1], strides = [1, 1]} : vector<8x64xi32> to vector<8x1xi32>
    %153 = vector.broadcast %152 : vector<8x1xi32> to vector<8x32xi32>
    %154 = arith.cmpi eq, %153, %2 : vector<8x32xi32>
    %155 = arith.extui %154 : vector<8x32xi1> to vector<8x32xi32>
    %156 = arith.sitofp %155 : vector<8x32xi32> to vector<8x32xf32>
    %157 = arith.addf %151, %156 : vector<8x32xf32>
    %158 = vector.extract_strided_slice %0 {offsets = [0, 26], sizes = [8, 1], strides = [1, 1]} : vector<8x64xi32> to vector<8x1xi32>
    %159 = vector.broadcast %158 : vector<8x1xi32> to vector<8x32xi32>
    %160 = arith.cmpi eq, %159, %2 : vector<8x32xi32>
    %161 = arith.extui %160 : vector<8x32xi1> to vector<8x32xi32>
    %162 = arith.sitofp %161 : vector<8x32xi32> to vector<8x32xf32>
    %163 = arith.addf %157, %162 : vector<8x32xf32>
    %164 = vector.extract_strided_slice %0 {offsets = [0, 27], sizes = [8, 1], strides = [1, 1]} : vector<8x64xi32> to vector<8x1xi32>
    %165 = vector.broadcast %164 : vector<8x1xi32> to vector<8x32xi32>
    %166 = arith.cmpi eq, %165, %2 : vector<8x32xi32>
    %167 = arith.extui %166 : vector<8x32xi1> to vector<8x32xi32>
    %168 = arith.sitofp %167 : vector<8x32xi32> to vector<8x32xf32>
    %169 = arith.addf %163, %168 : vector<8x32xf32>
    %cst_8 = arith.constant dense<0.000000e+00> : vector<8x8xf32>
    %170 = tpu.matmul %169, %1, %cst_8 {dimension_numbers = #tpu.dot_dimension_numbers<[1], [0], [0], [1], [0, 0, 1, 1], [], []>} : vector<8x32xf32>, vector<32x8xf32>, vector<8x8xf32> -> vector<8x8xf32>
    %171 = vector.extract_strided_slice %0 {offsets = [0, 28], sizes = [8, 1], strides = [1, 1]} : vector<8x64xi32> to vector<8x1xi32>
    %172 = vector.broadcast %171 : vector<8x1xi32> to vector<8x32xi32>
    %173 = arith.cmpi eq, %172, %2 : vector<8x32xi32>
    %174 = arith.extui %173 : vector<8x32xi1> to vector<8x32xi32>
    %175 = arith.sitofp %174 : vector<8x32xi32> to vector<8x32xf32>
    %176 = vector.extract_strided_slice %0 {offsets = [0, 29], sizes = [8, 1], strides = [1, 1]} : vector<8x64xi32> to vector<8x1xi32>
    %177 = vector.broadcast %176 : vector<8x1xi32> to vector<8x32xi32>
    %178 = arith.cmpi eq, %177, %2 : vector<8x32xi32>
    %179 = arith.extui %178 : vector<8x32xi1> to vector<8x32xi32>
    %180 = arith.sitofp %179 : vector<8x32xi32> to vector<8x32xf32>
    %181 = arith.addf %175, %180 : vector<8x32xf32>
    %182 = vector.extract_strided_slice %0 {offsets = [0, 30], sizes = [8, 1], strides = [1, 1]} : vector<8x64xi32> to vector<8x1xi32>
    %183 = vector.broadcast %182 : vector<8x1xi32> to vector<8x32xi32>
    %184 = arith.cmpi eq, %183, %2 : vector<8x32xi32>
    %185 = arith.extui %184 : vector<8x32xi1> to vector<8x32xi32>
    %186 = arith.sitofp %185 : vector<8x32xi32> to vector<8x32xf32>
    %187 = arith.addf %181, %186 : vector<8x32xf32>
    %188 = vector.extract_strided_slice %0 {offsets = [0, 31], sizes = [8, 1], strides = [1, 1]} : vector<8x64xi32> to vector<8x1xi32>
    %189 = vector.broadcast %188 : vector<8x1xi32> to vector<8x32xi32>
    %190 = arith.cmpi eq, %189, %2 : vector<8x32xi32>
    %191 = arith.extui %190 : vector<8x32xi1> to vector<8x32xi32>
    %192 = arith.sitofp %191 : vector<8x32xi32> to vector<8x32xf32>
    %193 = arith.addf %187, %192 : vector<8x32xf32>
    %cst_9 = arith.constant dense<0.000000e+00> : vector<8x8xf32>
    %194 = tpu.matmul %193, %1, %cst_9 {dimension_numbers = #tpu.dot_dimension_numbers<[1], [0], [0], [1], [0, 0, 1, 1], [], []>} : vector<8x32xf32>, vector<32x8xf32>, vector<8x8xf32> -> vector<8x8xf32>
    %195 = vector.extract_strided_slice %0 {offsets = [0, 32], sizes = [8, 1], strides = [1, 1]} : vector<8x64xi32> to vector<8x1xi32>
    %196 = vector.broadcast %195 : vector<8x1xi32> to vector<8x32xi32>
    %197 = arith.cmpi eq, %196, %2 : vector<8x32xi32>
    %198 = arith.extui %197 : vector<8x32xi1> to vector<8x32xi32>
    %199 = arith.sitofp %198 : vector<8x32xi32> to vector<8x32xf32>
    %200 = vector.extract_strided_slice %0 {offsets = [0, 33], sizes = [8, 1], strides = [1, 1]} : vector<8x64xi32> to vector<8x1xi32>
    %201 = vector.broadcast %200 : vector<8x1xi32> to vector<8x32xi32>
    %202 = arith.cmpi eq, %201, %2 : vector<8x32xi32>
    %203 = arith.extui %202 : vector<8x32xi1> to vector<8x32xi32>
    %204 = arith.sitofp %203 : vector<8x32xi32> to vector<8x32xf32>
    %205 = arith.addf %199, %204 : vector<8x32xf32>
    %206 = vector.extract_strided_slice %0 {offsets = [0, 34], sizes = [8, 1], strides = [1, 1]} : vector<8x64xi32> to vector<8x1xi32>
    %207 = vector.broadcast %206 : vector<8x1xi32> to vector<8x32xi32>
    %208 = arith.cmpi eq, %207, %2 : vector<8x32xi32>
    %209 = arith.extui %208 : vector<8x32xi1> to vector<8x32xi32>
    %210 = arith.sitofp %209 : vector<8x32xi32> to vector<8x32xf32>
    %211 = arith.addf %205, %210 : vector<8x32xf32>
    %212 = vector.extract_strided_slice %0 {offsets = [0, 35], sizes = [8, 1], strides = [1, 1]} : vector<8x64xi32> to vector<8x1xi32>
    %213 = vector.broadcast %212 : vector<8x1xi32> to vector<8x32xi32>
    %214 = arith.cmpi eq, %213, %2 : vector<8x32xi32>
    %215 = arith.extui %214 : vector<8x32xi1> to vector<8x32xi32>
    %216 = arith.sitofp %215 : vector<8x32xi32> to vector<8x32xf32>
    %217 = arith.addf %211, %216 : vector<8x32xf32>
    %cst_10 = arith.constant dense<0.000000e+00> : vector<8x8xf32>
    %218 = tpu.matmul %217, %1, %cst_10 {dimension_numbers = #tpu.dot_dimension_numbers<[1], [0], [0], [1], [0, 0, 1, 1], [], []>} : vector<8x32xf32>, vector<32x8xf32>, vector<8x8xf32> -> vector<8x8xf32>
    %219 = vector.extract_strided_slice %0 {offsets = [0, 36], sizes = [8, 1], strides = [1, 1]} : vector<8x64xi32> to vector<8x1xi32>
    %220 = vector.broadcast %219 : vector<8x1xi32> to vector<8x32xi32>
    %221 = arith.cmpi eq, %220, %2 : vector<8x32xi32>
    %222 = arith.extui %221 : vector<8x32xi1> to vector<8x32xi32>
    %223 = arith.sitofp %222 : vector<8x32xi32> to vector<8x32xf32>
    %224 = vector.extract_strided_slice %0 {offsets = [0, 37], sizes = [8, 1], strides = [1, 1]} : vector<8x64xi32> to vector<8x1xi32>
    %225 = vector.broadcast %224 : vector<8x1xi32> to vector<8x32xi32>
    %226 = arith.cmpi eq, %225, %2 : vector<8x32xi32>
    %227 = arith.extui %226 : vector<8x32xi1> to vector<8x32xi32>
    %228 = arith.sitofp %227 : vector<8x32xi32> to vector<8x32xf32>
    %229 = arith.addf %223, %228 : vector<8x32xf32>
    %230 = vector.extract_strided_slice %0 {offsets = [0, 38], sizes = [8, 1], strides = [1, 1]} : vector<8x64xi32> to vector<8x1xi32>
    %231 = vector.broadcast %230 : vector<8x1xi32> to vector<8x32xi32>
    %232 = arith.cmpi eq, %231, %2 : vector<8x32xi32>
    %233 = arith.extui %232 : vector<8x32xi1> to vector<8x32xi32>
    %234 = arith.sitofp %233 : vector<8x32xi32> to vector<8x32xf32>
    %235 = arith.addf %229, %234 : vector<8x32xf32>
    %236 = vector.extract_strided_slice %0 {offsets = [0, 39], sizes = [8, 1], strides = [1, 1]} : vector<8x64xi32> to vector<8x1xi32>
    %237 = vector.broadcast %236 : vector<8x1xi32> to vector<8x32xi32>
    %238 = arith.cmpi eq, %237, %2 : vector<8x32xi32>
    %239 = arith.extui %238 : vector<8x32xi1> to vector<8x32xi32>
    %240 = arith.sitofp %239 : vector<8x32xi32> to vector<8x32xf32>
    %241 = arith.addf %235, %240 : vector<8x32xf32>
    %cst_11 = arith.constant dense<0.000000e+00> : vector<8x8xf32>
    %242 = tpu.matmul %241, %1, %cst_11 {dimension_numbers = #tpu.dot_dimension_numbers<[1], [0], [0], [1], [0, 0, 1, 1], [], []>} : vector<8x32xf32>, vector<32x8xf32>, vector<8x8xf32> -> vector<8x8xf32>
    %243 = vector.extract_strided_slice %0 {offsets = [0, 40], sizes = [8, 1], strides = [1, 1]} : vector<8x64xi32> to vector<8x1xi32>
    %244 = vector.broadcast %243 : vector<8x1xi32> to vector<8x32xi32>
    %245 = arith.cmpi eq, %244, %2 : vector<8x32xi32>
    %246 = arith.extui %245 : vector<8x32xi1> to vector<8x32xi32>
    %247 = arith.sitofp %246 : vector<8x32xi32> to vector<8x32xf32>
    %248 = vector.extract_strided_slice %0 {offsets = [0, 41], sizes = [8, 1], strides = [1, 1]} : vector<8x64xi32> to vector<8x1xi32>
    %249 = vector.broadcast %248 : vector<8x1xi32> to vector<8x32xi32>
    %250 = arith.cmpi eq, %249, %2 : vector<8x32xi32>
    %251 = arith.extui %250 : vector<8x32xi1> to vector<8x32xi32>
    %252 = arith.sitofp %251 : vector<8x32xi32> to vector<8x32xf32>
    %253 = arith.addf %247, %252 : vector<8x32xf32>
    %254 = vector.extract_strided_slice %0 {offsets = [0, 42], sizes = [8, 1], strides = [1, 1]} : vector<8x64xi32> to vector<8x1xi32>
    %255 = vector.broadcast %254 : vector<8x1xi32> to vector<8x32xi32>
    %256 = arith.cmpi eq, %255, %2 : vector<8x32xi32>
    %257 = arith.extui %256 : vector<8x32xi1> to vector<8x32xi32>
    %258 = arith.sitofp %257 : vector<8x32xi32> to vector<8x32xf32>
    %259 = arith.addf %253, %258 : vector<8x32xf32>
    %260 = vector.extract_strided_slice %0 {offsets = [0, 43], sizes = [8, 1], strides = [1, 1]} : vector<8x64xi32> to vector<8x1xi32>
    %261 = vector.broadcast %260 : vector<8x1xi32> to vector<8x32xi32>
    %262 = arith.cmpi eq, %261, %2 : vector<8x32xi32>
    %263 = arith.extui %262 : vector<8x32xi1> to vector<8x32xi32>
    %264 = arith.sitofp %263 : vector<8x32xi32> to vector<8x32xf32>
    %265 = arith.addf %259, %264 : vector<8x32xf32>
    %cst_12 = arith.constant dense<0.000000e+00> : vector<8x8xf32>
    %266 = tpu.matmul %265, %1, %cst_12 {dimension_numbers = #tpu.dot_dimension_numbers<[1], [0], [0], [1], [0, 0, 1, 1], [], []>} : vector<8x32xf32>, vector<32x8xf32>, vector<8x8xf32> -> vector<8x8xf32>
    %267 = vector.extract_strided_slice %0 {offsets = [0, 44], sizes = [8, 1], strides = [1, 1]} : vector<8x64xi32> to vector<8x1xi32>
    %268 = vector.broadcast %267 : vector<8x1xi32> to vector<8x32xi32>
    %269 = arith.cmpi eq, %268, %2 : vector<8x32xi32>
    %270 = arith.extui %269 : vector<8x32xi1> to vector<8x32xi32>
    %271 = arith.sitofp %270 : vector<8x32xi32> to vector<8x32xf32>
    %272 = vector.extract_strided_slice %0 {offsets = [0, 45], sizes = [8, 1], strides = [1, 1]} : vector<8x64xi32> to vector<8x1xi32>
    %273 = vector.broadcast %272 : vector<8x1xi32> to vector<8x32xi32>
    %274 = arith.cmpi eq, %273, %2 : vector<8x32xi32>
    %275 = arith.extui %274 : vector<8x32xi1> to vector<8x32xi32>
    %276 = arith.sitofp %275 : vector<8x32xi32> to vector<8x32xf32>
    %277 = arith.addf %271, %276 : vector<8x32xf32>
    %278 = vector.extract_strided_slice %0 {offsets = [0, 46], sizes = [8, 1], strides = [1, 1]} : vector<8x64xi32> to vector<8x1xi32>
    %279 = vector.broadcast %278 : vector<8x1xi32> to vector<8x32xi32>
    %280 = arith.cmpi eq, %279, %2 : vector<8x32xi32>
    %281 = arith.extui %280 : vector<8x32xi1> to vector<8x32xi32>
    %282 = arith.sitofp %281 : vector<8x32xi32> to vector<8x32xf32>
    %283 = arith.addf %277, %282 : vector<8x32xf32>
    %284 = vector.extract_strided_slice %0 {offsets = [0, 47], sizes = [8, 1], strides = [1, 1]} : vector<8x64xi32> to vector<8x1xi32>
    %285 = vector.broadcast %284 : vector<8x1xi32> to vector<8x32xi32>
    %286 = arith.cmpi eq, %285, %2 : vector<8x32xi32>
    %287 = arith.extui %286 : vector<8x32xi1> to vector<8x32xi32>
    %288 = arith.sitofp %287 : vector<8x32xi32> to vector<8x32xf32>
    %289 = arith.addf %283, %288 : vector<8x32xf32>
    %cst_13 = arith.constant dense<0.000000e+00> : vector<8x8xf32>
    %290 = tpu.matmul %289, %1, %cst_13 {dimension_numbers = #tpu.dot_dimension_numbers<[1], [0], [0], [1], [0, 0, 1, 1], [], []>} : vector<8x32xf32>, vector<32x8xf32>, vector<8x8xf32> -> vector<8x8xf32>
    %291 = vector.extract_strided_slice %0 {offsets = [0, 48], sizes = [8, 1], strides = [1, 1]} : vector<8x64xi32> to vector<8x1xi32>
    %292 = vector.broadcast %291 : vector<8x1xi32> to vector<8x32xi32>
    %293 = arith.cmpi eq, %292, %2 : vector<8x32xi32>
    %294 = arith.extui %293 : vector<8x32xi1> to vector<8x32xi32>
    %295 = arith.sitofp %294 : vector<8x32xi32> to vector<8x32xf32>
    %296 = vector.extract_strided_slice %0 {offsets = [0, 49], sizes = [8, 1], strides = [1, 1]} : vector<8x64xi32> to vector<8x1xi32>
    %297 = vector.broadcast %296 : vector<8x1xi32> to vector<8x32xi32>
    %298 = arith.cmpi eq, %297, %2 : vector<8x32xi32>
    %299 = arith.extui %298 : vector<8x32xi1> to vector<8x32xi32>
    %300 = arith.sitofp %299 : vector<8x32xi32> to vector<8x32xf32>
    %301 = arith.addf %295, %300 : vector<8x32xf32>
    %302 = vector.extract_strided_slice %0 {offsets = [0, 50], sizes = [8, 1], strides = [1, 1]} : vector<8x64xi32> to vector<8x1xi32>
    %303 = vector.broadcast %302 : vector<8x1xi32> to vector<8x32xi32>
    %304 = arith.cmpi eq, %303, %2 : vector<8x32xi32>
    %305 = arith.extui %304 : vector<8x32xi1> to vector<8x32xi32>
    %306 = arith.sitofp %305 : vector<8x32xi32> to vector<8x32xf32>
    %307 = arith.addf %301, %306 : vector<8x32xf32>
    %308 = vector.extract_strided_slice %0 {offsets = [0, 51], sizes = [8, 1], strides = [1, 1]} : vector<8x64xi32> to vector<8x1xi32>
    %309 = vector.broadcast %308 : vector<8x1xi32> to vector<8x32xi32>
    %310 = arith.cmpi eq, %309, %2 : vector<8x32xi32>
    %311 = arith.extui %310 : vector<8x32xi1> to vector<8x32xi32>
    %312 = arith.sitofp %311 : vector<8x32xi32> to vector<8x32xf32>
    %313 = arith.addf %307, %312 : vector<8x32xf32>
    %cst_14 = arith.constant dense<0.000000e+00> : vector<8x8xf32>
    %314 = tpu.matmul %313, %1, %cst_14 {dimension_numbers = #tpu.dot_dimension_numbers<[1], [0], [0], [1], [0, 0, 1, 1], [], []>} : vector<8x32xf32>, vector<32x8xf32>, vector<8x8xf32> -> vector<8x8xf32>
    %315 = vector.extract_strided_slice %0 {offsets = [0, 52], sizes = [8, 1], strides = [1, 1]} : vector<8x64xi32> to vector<8x1xi32>
    %316 = vector.broadcast %315 : vector<8x1xi32> to vector<8x32xi32>
    %317 = arith.cmpi eq, %316, %2 : vector<8x32xi32>
    %318 = arith.extui %317 : vector<8x32xi1> to vector<8x32xi32>
    %319 = arith.sitofp %318 : vector<8x32xi32> to vector<8x32xf32>
    %320 = vector.extract_strided_slice %0 {offsets = [0, 53], sizes = [8, 1], strides = [1, 1]} : vector<8x64xi32> to vector<8x1xi32>
    %321 = vector.broadcast %320 : vector<8x1xi32> to vector<8x32xi32>
    %322 = arith.cmpi eq, %321, %2 : vector<8x32xi32>
    %323 = arith.extui %322 : vector<8x32xi1> to vector<8x32xi32>
    %324 = arith.sitofp %323 : vector<8x32xi32> to vector<8x32xf32>
    %325 = arith.addf %319, %324 : vector<8x32xf32>
    %326 = vector.extract_strided_slice %0 {offsets = [0, 54], sizes = [8, 1], strides = [1, 1]} : vector<8x64xi32> to vector<8x1xi32>
    %327 = vector.broadcast %326 : vector<8x1xi32> to vector<8x32xi32>
    %328 = arith.cmpi eq, %327, %2 : vector<8x32xi32>
    %329 = arith.extui %328 : vector<8x32xi1> to vector<8x32xi32>
    %330 = arith.sitofp %329 : vector<8x32xi32> to vector<8x32xf32>
    %331 = arith.addf %325, %330 : vector<8x32xf32>
    %332 = vector.extract_strided_slice %0 {offsets = [0, 55], sizes = [8, 1], strides = [1, 1]} : vector<8x64xi32> to vector<8x1xi32>
    %333 = vector.broadcast %332 : vector<8x1xi32> to vector<8x32xi32>
    %334 = arith.cmpi eq, %333, %2 : vector<8x32xi32>
    %335 = arith.extui %334 : vector<8x32xi1> to vector<8x32xi32>
    %336 = arith.sitofp %335 : vector<8x32xi32> to vector<8x32xf32>
    %337 = arith.addf %331, %336 : vector<8x32xf32>
    %cst_15 = arith.constant dense<0.000000e+00> : vector<8x8xf32>
    %338 = tpu.matmul %337, %1, %cst_15 {dimension_numbers = #tpu.dot_dimension_numbers<[1], [0], [0], [1], [0, 0, 1, 1], [], []>} : vector<8x32xf32>, vector<32x8xf32>, vector<8x8xf32> -> vector<8x8xf32>
    %339 = vector.extract_strided_slice %0 {offsets = [0, 56], sizes = [8, 1], strides = [1, 1]} : vector<8x64xi32> to vector<8x1xi32>
    %340 = vector.broadcast %339 : vector<8x1xi32> to vector<8x32xi32>
    %341 = arith.cmpi eq, %340, %2 : vector<8x32xi32>
    %342 = arith.extui %341 : vector<8x32xi1> to vector<8x32xi32>
    %343 = arith.sitofp %342 : vector<8x32xi32> to vector<8x32xf32>
    %344 = vector.extract_strided_slice %0 {offsets = [0, 57], sizes = [8, 1], strides = [1, 1]} : vector<8x64xi32> to vector<8x1xi32>
    %345 = vector.broadcast %344 : vector<8x1xi32> to vector<8x32xi32>
    %346 = arith.cmpi eq, %345, %2 : vector<8x32xi32>
    %347 = arith.extui %346 : vector<8x32xi1> to vector<8x32xi32>
    %348 = arith.sitofp %347 : vector<8x32xi32> to vector<8x32xf32>
    %349 = arith.addf %343, %348 : vector<8x32xf32>
    %350 = vector.extract_strided_slice %0 {offsets = [0, 58], sizes = [8, 1], strides = [1, 1]} : vector<8x64xi32> to vector<8x1xi32>
    %351 = vector.broadcast %350 : vector<8x1xi32> to vector<8x32xi32>
    %352 = arith.cmpi eq, %351, %2 : vector<8x32xi32>
    %353 = arith.extui %352 : vector<8x32xi1> to vector<8x32xi32>
    %354 = arith.sitofp %353 : vector<8x32xi32> to vector<8x32xf32>
    %355 = arith.addf %349, %354 : vector<8x32xf32>
    %356 = vector.extract_strided_slice %0 {offsets = [0, 59], sizes = [8, 1], strides = [1, 1]} : vector<8x64xi32> to vector<8x1xi32>
    %357 = vector.broadcast %356 : vector<8x1xi32> to vector<8x32xi32>
    %358 = arith.cmpi eq, %357, %2 : vector<8x32xi32>
    %359 = arith.extui %358 : vector<8x32xi1> to vector<8x32xi32>
    %360 = arith.sitofp %359 : vector<8x32xi32> to vector<8x32xf32>
    %361 = arith.addf %355, %360 : vector<8x32xf32>
    %cst_16 = arith.constant dense<0.000000e+00> : vector<8x8xf32>
    %362 = tpu.matmul %361, %1, %cst_16 {dimension_numbers = #tpu.dot_dimension_numbers<[1], [0], [0], [1], [0, 0, 1, 1], [], []>} : vector<8x32xf32>, vector<32x8xf32>, vector<8x8xf32> -> vector<8x8xf32>
    %363 = vector.extract_strided_slice %0 {offsets = [0, 60], sizes = [8, 1], strides = [1, 1]} : vector<8x64xi32> to vector<8x1xi32>
    %364 = vector.broadcast %363 : vector<8x1xi32> to vector<8x32xi32>
    %365 = arith.cmpi eq, %364, %2 : vector<8x32xi32>
    %366 = arith.extui %365 : vector<8x32xi1> to vector<8x32xi32>
    %367 = arith.sitofp %366 : vector<8x32xi32> to vector<8x32xf32>
    %368 = vector.extract_strided_slice %0 {offsets = [0, 61], sizes = [8, 1], strides = [1, 1]} : vector<8x64xi32> to vector<8x1xi32>
    %369 = vector.broadcast %368 : vector<8x1xi32> to vector<8x32xi32>
    %370 = arith.cmpi eq, %369, %2 : vector<8x32xi32>
    %371 = arith.extui %370 : vector<8x32xi1> to vector<8x32xi32>
    %372 = arith.sitofp %371 : vector<8x32xi32> to vector<8x32xf32>
    %373 = arith.addf %367, %372 : vector<8x32xf32>
    %374 = vector.extract_strided_slice %0 {offsets = [0, 62], sizes = [8, 1], strides = [1, 1]} : vector<8x64xi32> to vector<8x1xi32>
    %375 = vector.broadcast %374 : vector<8x1xi32> to vector<8x32xi32>
    %376 = arith.cmpi eq, %375, %2 : vector<8x32xi32>
    %377 = arith.extui %376 : vector<8x32xi1> to vector<8x32xi32>
    %378 = arith.sitofp %377 : vector<8x32xi32> to vector<8x32xf32>
    %379 = arith.addf %373, %378 : vector<8x32xf32>
    %380 = vector.extract_strided_slice %0 {offsets = [0, 63], sizes = [8, 1], strides = [1, 1]} : vector<8x64xi32> to vector<8x1xi32>
    %381 = vector.broadcast %380 : vector<8x1xi32> to vector<8x32xi32>
    %382 = arith.cmpi eq, %381, %2 : vector<8x32xi32>
    %383 = arith.extui %382 : vector<8x32xi1> to vector<8x32xi32>
    %384 = arith.sitofp %383 : vector<8x32xi32> to vector<8x32xf32>
    %385 = arith.addf %379, %384 : vector<8x32xf32>
    %cst_17 = arith.constant dense<0.000000e+00> : vector<8x8xf32>
    %386 = tpu.matmul %385, %1, %cst_17 {dimension_numbers = #tpu.dot_dimension_numbers<[1], [0], [0], [1], [0, 0, 1, 1], [], []>} : vector<8x32xf32>, vector<32x8xf32>, vector<8x8xf32> -> vector<8x8xf32>
    %387 = tpu.concatenate %26, %50, %74, %98, %122, %146, %170, %194, %218, %242, %266, %290, %314, %338, %362, %386 in 1 : vector<8x8xf32>, vector<8x8xf32>, vector<8x8xf32>, vector<8x8xf32>, vector<8x8xf32>, vector<8x8xf32>, vector<8x8xf32>, vector<8x8xf32>, vector<8x8xf32>, vector<8x8xf32>, vector<8x8xf32>, vector<8x8xf32>, vector<8x8xf32>, vector<8x8xf32>, vector<8x8xf32>, vector<8x8xf32> -> vector<8x128xf32>
    %c0_18 = arith.constant 0 : index
    %c0_19 = arith.constant 0 : index
    %388 = vector.load %arg3[%c0_18, %c0_19] : memref<8x128xf32, #tpu.memory_space<vmem>>, vector<8x128xf32>
    tpu.vector_store %arg3[%c0_18, %c0_19], %387 {strides = array<i32>} : memref<8x128xf32, #tpu.memory_space<vmem>>, vector<8x128xf32>,
    return
  }
  func.func @transform_0(%arg0: i32) -> (i32, i32) {
    %c0_i32 = arith.constant 0 : i32
    %c0_i32_0 = arith.constant 0 : i32
    return %arg0, %c0_i32 : i32, i32
  }
  func.func @transform_1(%arg0: i32) -> (i32, i32) {
    %c0_i32 = arith.constant 0 : i32
    %c0_i32_0 = arith.constant 0 : i32
    %c0_i32_1 = arith.constant 0 : i32
    return %c0_i32, %c0_i32_0 : i32, i32
  }
  func.func @transform_2(%arg0: i32) -> (i32, i32) {
    %c0_i32 = arith.constant 0 : i32
    %c0_i32_0 = arith.constant 0 : i32
    return %arg0, %c0_i32 : i32, i32
  }
}

</mosaic_0001>

<llo_original>
// kernel: tpu_custom_call.1
$region0: #{tpu_custom_call.1}
  #allocation0 [shape = 'u32[]', space=smem, size = 0x4, offset = 0x4, fixed_abs, tag = 'smem constant byte address 0x4 - core index']
  #allocation1 [shape = 'u32[72,128]{1,0:T(1,128)}', space=vmem, size = 0x9000, scoped, tag = 'internal scratch']
  %s0 = inlined_call_operand.vmem [shape: s32[16,64], index: 0, kind: input, shape index: {}]
  %s1 = inlined_call_operand.vmem [shape: f32[32,8], index: 1, kind: input, shape index: {}]
  %s2 = inlined_call_operand.hbm [shape: f32[16,128], index: 2, kind: output, shape index: {}]
  %s3 = sld [smem:[#allocation0]]
  $region41: #{tpu_custom_call.1} parent=0
    _
  %s5 = ssub.s32 1, %s3
  %s6 = scalar_select 0, %s5, %s3
  $region1: #{tpu_custom_call.1} parent=0
    #allocation2 [shape = 'u8[8192]{0}', space=vmem, size = 0x2000, scoped, tag = 'output window, operand 0']
    #allocation3 [shape = 's32[2]{0}', space=sflag, size = 0x8, scoped, tag = 'scoped memory for tpu_custom_call.1']
    %7 = vsyncpa [#allocation3], 0
    %s8 = scalar_lea.sflag [#allocation3], 1
    %9 = vsyncpa %s8, 0
    loop: start=0, step=1, limit=4
    $region2: #{tpu_custom_call.1} parent=1 // loop_pre_header
      _
    $region3: #{tpu_custom_call.1} parent=1 // loop_header
      %s11 = sphi 0, %s15
      %p12 = scmp.ge.s32.totalorder %s11, 4
      %s21 = sphi 0, %s23
      %s24 = sphi 0, %s21
      %s25 = sphi 0, %s24
      %s41 = sphi 0, %s25
      %s45 = sphi 0, %s45
      %s47 = sphi 0, %s45
      %s48 = sphi 0, %s47
      %s62 = sphi 0, %s48
      %s68 = sphi 0, %s70
      %s71 = sphi 0, %s68
      %s72 = sphi 0, %s71
      %s88 = sphi 0, %s72
    $region4: #{tpu_custom_call.1} parent=1 // loop_header_branch
      %14 = sbr.rel (%p12) target = $region8
    $region5: #{tpu_custom_call.1} parent=1 // loop_body
      %s16 = ssub.s32 %s11, 1
      %s17 = ssub.s32 %s11, 2
      %s18 = sadd.s32 %s11, 1
      %s19 = ssub.s32 %s11, %s18
      %p20 = scmp.eq.s32.totalorder %s19, 0
      %s22 = sadd.s32 %s21, 1
      %s23 = scalar_select %p20, %s21, %s22
      %p26 = pneg %p20
      %p27 = scmp.eq.s32.totalorder %s11, 1
      %p28 = por %p26, %p27
      %p29 = scmp.ne.s32.totalorder %s21, %s24
      %p30 = scmp.eq.s32.totalorder %s11, 0
      %p31 = por %p29, %p30
      %p32 = scmp.ne.s32.totalorder %s21, %s24
      %p33 = scmp.eq.s32.totalorder %s16, 1
      %p34 = por %p32, %p33
      %p35 = scmp.ne.s32.totalorder %s24, %s25
      %p36 = scmp.eq.s32.totalorder %s16, 0
      %p37 = por %p35, %p36
      %p38 = scmp.ne.s32.totalorder %s24, %s25
      %p39 = scmp.eq.s32.totalorder %s17, 1
      %p40 = por %p38, %p39
      %p42 = scmp.ne.s32.totalorder %s25, %s41
      %p43 = scmp.eq.s32.totalorder %s17, 0
      %p44 = por %p42, %p43
      %s46 = sadd.s32 %s45, 1
      %p49 = scmp.eq.s32.totalorder %s11, 1
      %p50 = scmp.ne.s32.totalorder %s45, %s47
      %p51 = scmp.eq.s32.totalorder %s11, 0
      %p52 = por %p50, %p51
      %p53 = scmp.ne.s32.totalorder %s45, %s47
      %p54 = scmp.eq.s32.totalorder %s16, 1
      %p55 = por %p53, %p54
      %p56 = scmp.ne.s32.totalorder %s47, %s48
      %p57 = scmp.eq.s32.totalorder %s16, 0
      %p58 = por %p56, %p57
      %p59 = scmp.ne.s32.totalorder %s47, %s48
      %p60 = scmp.eq.s32.totalorder %s17, 1
      %p61 = por %p59, %p60
      %p63 = scmp.ne.s32.totalorder %s48, %s62
      %p64 = scmp.eq.s32.totalorder %s17, 0
      %p65 = por %p63, %p64
      %s66 = ssub.s32 %s11, %s18
      %p67 = scmp.eq.s32.totalorder %s66, 0
      %s69 = sadd.s32 %s68, 1
      %s70 = scalar_select %p67, %s68, %s69
      %p73 = pneg %p67
      %p74 = scmp.eq.s32.totalorder %s11, 1
      %p75 = por %p73, %p74
      %p76 = scmp.ne.s32.totalorder %s68, %s71
      %p77 = scmp.eq.s32.totalorder %s11, 0
      %p78 = por %p76, %p77
      %p79 = scmp.ne.s32.totalorder %s68, %s71
      %p80 = scmp.eq.s32.totalorder %s16, 1
      %p81 = por %p79, %p80
      %p82 = scmp.ne.s32.totalorder %s71, %s72
      %p83 = scmp.eq.s32.totalorder %s16, 0
      %p84 = por %p82, %p83
      %p85 = scmp.ne.s32.totalorder %s71, %s72
      %p86 = scmp.eq.s32.totalorder %s17, 1
      %p87 = por %p85, %p86
      %p89 = scmp.ne.s32.totalorder %s72, %s88
      %p90 = scmp.eq.s32.totalorder %s17, 0
      %p91 = por %p89, %p90
      %p92 = scmp.le.s32.totalorder 1, %s11
      %p93 = scmp.lt.s32.totalorder %s11, 3
      %p94 = pnand %p92, %p93
      %p95 = pneg %p94
      // Predicated region
      $region9: #{tpu_custom_call.1} parent=5 // pred_check
        _
      $region10: #{tpu_custom_call.1} parent=5 // pred_check_branch
        %97 = sbr.rel (%p94) target = $region12
      $region11: #{tpu_custom_call.1} parent=5 // pred_region
        %s98 = ssub.s32 %s11, 1
        // Predicated region
        $region13: #{tpu_custom_call.1} parent=11 // pred_check
          %p99 = pneg %p58
        $region14: #{tpu_custom_call.1} parent=11 // pred_check_branch
          %101 = sbr.rel (%p99) target = $region16
        $region15: #{tpu_custom_call.1} parent=11 // pred_region
          _
        $region16: #{tpu_custom_call.1} parent=11 // pred_fallthru
          _
      $region12: #{tpu_custom_call.1} parent=5 // pred_fallthru
        _
      %p102 = scmp.lt.s32.totalorder %s11, 2
      // Predicated region
      $region17: #{tpu_custom_call.1} parent=5 // pred_check
        %p103 = pneg %p102
      $region18: #{tpu_custom_call.1} parent=5 // pred_check_branch
        %105 = sbr.rel (%p103) target = $region20
      $region19: #{tpu_custom_call.1} parent=5 // pred_region
        // Predicated region
        $region21: #{tpu_custom_call.1} parent=19 // pred_check
          %p106 = pneg %p31
        $region22: #{tpu_custom_call.1} parent=19 // pred_check_branch
          %108 = sbr.rel (%p106) target = $region24
        $region23: #{tpu_custom_call.1} parent=19 // pred_region
          %p109 = scmp.lt.s32.totalorder %s11, 1
          %s110 = scalar_select %p109, %s11, 1
          %s111 = smul.addr %s110, 8
          %s112 = scalar_lea.vmem %s0, %s111
        $region24: #{tpu_custom_call.1} parent=19 // pred_fallthru
          _
      $region20: #{tpu_custom_call.1} parent=5 // pred_fallthru
        _
      %p113 = scmp.le.s32.totalorder 1, %s11
      %p114 = scmp.lt.s32.totalorder %s11, 3
      %p115 = pnand %p113, %p114
      %p116 = pneg %p115
      // Predicated region
      $region25: #{tpu_custom_call.1} parent=5 // pred_check
        _
      $region26: #{tpu_custom_call.1} parent=5 // pred_check_branch
        %118 = sbr.rel (%p115) target = $region28
      $region27: #{tpu_custom_call.1} parent=5 // pred_region
        %s119 = ssub.s32 %s11, 1
        %p120 = scmp.lt.s32.totalorder %s16, 1
        %s121 = scalar_select %p120, %s16, 1
        %s122 = smul.addr %s121, 8
        %s123 = scalar_lea.vmem %s0, %s122
        %p124 = pneg %p37
        %p125 = pneg %p34
        %p126 = pneg %p58
        %p127 = pneg %p55
        %p128 = pneg %p84
        %p129 = pneg %p81
        %s130 = sand.u32 %s71, 1
        %s131 = scalar_lea.sflag [#allocation3], %s130
        %s132 = sand.u32 %s71, 1
        %s133 = smul.addr %s132, 8
        %s134 = scalar_lea.vmem [#allocation2], %s133
        %p135 = scmp.lt.s32.totalorder %s16, 1
        %s136 = scalar_select %p135, %s16, 1
        %s137 = smul.addr %s136, 8
        %s138 = scalar_lea.vmem %s0, %s137
        %v139 = vld [vmem:[%s138] sm:$0xff]
        %v140 = vld [vmem:[%s1] sm:$0xff]
        %v141 = vld [vmem:[%s1 + $0x8] sm:$0xff]
        %v142 = vld [vmem:[%s1 + $0x10] sm:$0xff]
        %v143 = vld [vmem:[%s1 + $0x18] sm:$0xff]
        %v144 = vlaneseq
        %v145 = vand.u32 %v144, 127
        %146 = vset.pattern.permute.xlu0 0
        %147 = vperm.xlu0 %146, %v139
        %v148 = vpop.permute.xlu0 %147
        %vm149 = vcmp.eq.s32.totalorder %v148, %v145
        %v150 = vsel %vm149, 1, 0
        %v151 = vcvt.s32.f32 %v150
        %152 = vset.pattern.permute.xlu0 1
        %153 = vperm.xlu0 %152, %v139
        %v154 = vpop.permute.xlu0 %153
        %vm155 = vcmp.eq.s32.totalorder %v154, %v145
        %v156 = vsel %vm155, 1, 0
        %v157 = vcvt.s32.f32 %v156
        %v158 = vadd.f32 %v151, %v157
        %159 = vset.pattern.permute.xlu0 2
        %160 = vperm.xlu0 %159, %v139
        %v161 = vpop.permute.xlu0 %160
        %vm162 = vcmp.eq.s32.totalorder %v161, %v145
        %v163 = vsel %vm162, 1, 0
        %v164 = vcvt.s32.f32 %v163
        %v165 = vadd.f32 %v158, %v164
        %166 = vset.pattern.permute.xlu0 3
        %167 = vperm.xlu0 %166, %v139
        %v168 = vpop.permute.xlu0 %167
        %vm169 = vcmp.eq.s32.totalorder %v168, %v145
        %v170 = vsel %vm169, 1, 0
        %v171 = vcvt.s32.f32 %v170
        %v172 = vadd.f32 %v165, %v171
        %vm173 = vcmask 261120
        %v175 = vsel %vm173, %v172, 0
        %177 = vmatpush.msra.mxu0 0.0
        %178 = vmatpush.msra.mxu0 0.0
        %179 = vmatpush.msra.mxu0 0.0
        %180 = vmatpush.msra.mxu0 0.0
        %181 = vmatpush.msra.mxu0 0.0
        %182 = vmatpush.msra.mxu0 0.0
        %183 = vmatpush.msra.mxu0 0.0
        %184 = vmatpush.msra.mxu0 0.0
        %185 = vmatpush.msra.mxu0 0.0
        %186 = vmatpush.msra.mxu0 0.0
        %187 = vmatpush.msra.mxu0 0.0
        %188 = vmatpush.msra.mxu0 0.0
        %189 = vmatpush.msra.mxu0 %v143
        %190 = vmatpush.msra.mxu0 %v142
        %191 = vmatpush.msra.mxu0 %v141
        %192 = vmatpush.msra.mxu0 %v140
        %193 = vmatmul.f32.gmra.mxu0 %v175
        %v194 = vpop.f32.mrf.mxu0
        %v195 = vadd.f32 0.0, %v194
        %196 = vdwg.mxu0
        %197 = vset.pattern.permute.xlu0 4
        %198 = vperm.xlu0 %197, %v139
        %v199 = vpop.permute.xlu0 %198
        %vm200 = vcmp.eq.s32.totalorder %v199, %v145
        %v201 = vsel %vm200, 1, 0
        %v202 = vcvt.s32.f32 %v201
        %203 = vset.pattern.permute.xlu0 5
        %204 = vperm.xlu0 %203, %v139
        %v205 = vpop.permute.xlu0 %204
        %vm206 = vcmp.eq.s32.totalorder %v205, %v145
        %v207 = vsel %vm206, 1, 0
        %v208 = vcvt.s32.f32 %v207
        %v209 = vadd.f32 %v202, %v208
        %210 = vset.pattern.permute.xlu0 6
        %211 = vperm.xlu0 %210, %v139
        %v212 = vpop.permute.xlu0 %211
        %vm213 = vcmp.eq.s32.totalorder %v212, %v145
        %v214 = vsel %vm213, 1, 0
        %v215 = vcvt.s32.f32 %v214
        %v216 = vadd.f32 %v209, %v215
        %217 = vset.pattern.permute.xlu0 7
        %218 = vperm.xlu0 %217, %v139
        %v219 = vpop.permute.xlu0 %218
        %vm220 = vcmp.eq.s32.totalorder %v219, %v145
        %v221 = vsel %vm220, 1, 0
        %v222 = vcvt.s32.f32 %v221
        %v223 = vadd.f32 %v216, %v222
        %v225 = vsel %vm173, %v223, 0
        %227 = vmatpush.msra.mxu0 0.0
        %228 = vmatpush.msra.mxu0 0.0
        %229 = vmatpush.msra.mxu0 0.0
        %230 = vmatpush.msra.mxu0 0.0
        %231 = vmatpush.msra.mxu0 0.0
        %232 = vmatpush.msra.mxu0 0.0
        %233 = vmatpush.msra.mxu0 0.0
        %234 = vmatpush.msra.mxu0 0.0
        %235 = vmatpush.msra.mxu0 0.0
        %236 = vmatpush.msra.mxu0 0.0
        %237 = vmatpush.msra.mxu0 0.0
        %238 = vmatpush.msra.mxu0 0.0
        %239 = vmatpush.msra.mxu0 %v143
        %240 = vmatpush.msra.mxu0 %v142
        %241 = vmatpush.msra.mxu0 %v141
        %242 = vmatpush.msra.mxu0 %v140
        %243 = vmatmul.f32.gmra.mxu0 %v225
        %v244 = vpop.f32.mrf.mxu0
        %v245 = vadd.f32 0.0, %v244
        %246 = vdwg.mxu0
        %247 = vset.pattern.permute.xlu0 8
        %248 = vperm.xlu0 %247, %v139
        %v249 = vpop.permute.xlu0 %248
        %vm250 = vcmp.eq.s32.totalorder %v249, %v145
        %v251 = vsel %vm250, 1, 0
        %v252 = vcvt.s32.f32 %v251
        %253 = vset.pattern.permute.xlu0 9
        %254 = vperm.xlu0 %253, %v139
        %v255 = vpop.permute.xlu0 %254
        %vm256 = vcmp.eq.s32.totalorder %v255, %v145
        %v257 = vsel %vm256, 1, 0
        %v258 = vcvt.s32.f32 %v257
        %v259 = vadd.f32 %v252, %v258
        %260 = vset.pattern.permute.xlu0 10
        %261 = vperm.xlu0 %260, %v139
        %v262 = vpop.permute.xlu0 %261
        %vm263 = vcmp.eq.s32.totalorder %v262, %v145
        %v264 = vsel %vm263, 1, 0
        %v265 = vcvt.s32.f32 %v264
        %v266 = vadd.f32 %v259, %v265
        %267 = vset.pattern.permute.xlu0 11
        %268 = vperm.xlu0 %267, %v139
        %v269 = vpop.permute.xlu0 %268
        %vm270 = vcmp.eq.s32.totalorder %v269, %v145
        %v271 = vsel %vm270, 1, 0
        %v272 = vcvt.s32.f32 %v271
        %v273 = vadd.f32 %v266, %v272
        %v275 = vsel %vm173, %v273, 0
        %277 = vmatpush.msra.mxu0 0.0
        %278 = vmatpush.msra.mxu0 0.0
        %279 = vmatpush.msra.mxu0 0.0
        %280 = vmatpush.msra.mxu0 0.0
        %281 = vmatpush.msra.mxu0 0.0
        %282 = vmatpush.msra.mxu0 0.0
        %283 = vmatpush.msra.mxu0 0.0
        %284 = vmatpush.msra.mxu0 0.0
        %285 = vmatpush.msra.mxu0 0.0
        %286 = vmatpush.msra.mxu0 0.0
        %287 = vmatpush.msra.mxu0 0.0
        %288 = vmatpush.msra.mxu0 0.0
        %289 = vmatpush.msra.mxu0 %v143
        %290 = vmatpush.msra.mxu0 %v142
        %291 = vmatpush.msra.mxu0 %v141
        %292 = vmatpush.msra.mxu0 %v140
        %293 = vmatmul.f32.gmra.mxu0 %v275
        %v294 = vpop.f32.mrf.mxu0
        %v295 = vadd.f32 0.0, %v294
        %296 = vdwg.mxu0
        %297 = vset.pattern.permute.xlu0 12
        %298 = vperm.xlu0 %297, %v139
        %v299 = vpop.permute.xlu0 %298
        %vm300 = vcmp.eq.s32.totalorder %v299, %v145
        %v301 = vsel %vm300, 1, 0
        %v302 = vcvt.s32.f32 %v301
        %303 = vset.pattern.permute.xlu0 13
        %304 = vperm.xlu0 %303, %v139
        %v305 = vpop.permute.xlu0 %304
        %vm306 = vcmp.eq.s32.totalorder %v305, %v145
        %v307 = vsel %vm306, 1, 0
        %v308 = vcvt.s32.f32 %v307
        %v309 = vadd.f32 %v302, %v308
        %310 = vset.pattern.permute.xlu0 14
        %311 = vperm.xlu0 %310, %v139
        %v312 = vpop.permute.xlu0 %311
        %vm313 = vcmp.eq.s32.totalorder %v312, %v145
        %v314 = vsel %vm313, 1, 0
        %v315 = vcvt.s32.f32 %v314
        %v316 = vadd.f32 %v309, %v315
        %317 = vset.pattern.permute.xlu0 15
        %318 = vperm.xlu0 %317, %v139
        %v319 = vpop.permute.xlu0 %318
        %vm320 = vcmp.eq.s32.totalorder %v319, %v145
        %v321 = vsel %vm320, 1, 0
        %v322 = vcvt.s32.f32 %v321
        %v323 = vadd.f32 %v316, %v322
        %v325 = vsel %vm173, %v323, 0
        %327 = vmatpush.msra.mxu0 0.0
        %328 = vmatpush.msra.mxu0 0.0
        %329 = vmatpush.msra.mxu0 0.0
        %330 = vmatpush.msra.mxu0 0.0
        %331 = vmatpush.msra.mxu0 0.0
        %332 = vmatpush.msra.mxu0 0.0
        %333 = vmatpush.msra.mxu0 0.0
        %334 = vmatpush.msra.mxu0 0.0
        %335 = vmatpush.msra.mxu0 0.0
        %336 = vmatpush.msra.mxu0 0.0
        %337 = vmatpush.msra.mxu0 0.0
        %338 = vmatpush.msra.mxu0 0.0
        %339 = vmatpush.msra.mxu0 %v143
        %340 = vmatpush.msra.mxu0 %v142
        %341 = vmatpush.msra.mxu0 %v141
        %342 = vmatpush.msra.mxu0 %v140
        %343 = vmatmul.f32.gmra.mxu0 %v325
        %v344 = vpop.f32.mrf.mxu0
        %v345 = vadd.f32 0.0, %v344
        %346 = vdwg.mxu0
        %347 = vset.pattern.permute.xlu0 16
        %348 = vperm.xlu0 %347, %v139
        %v349 = vpop.permute.xlu0 %348
        %vm350 = vcmp.eq.s32.totalorder %v349, %v145
        %v351 = vsel %vm350, 1, 0
        %v352 = vcvt.s32.f32 %v351
        %353 = vset.pattern.permute.xlu0 17
        %354 = vperm.xlu0 %353, %v139
        %v355 = vpop.permute.xlu0 %354
        %vm356 = vcmp.eq.s32.totalorder %v355, %v145
        %v357 = vsel %vm356, 1, 0
        %v358 = vcvt.s32.f32 %v357
        %v359 = vadd.f32 %v352, %v358
        %360 = vset.pattern.permute.xlu0 18
        %361 = vperm.xlu0 %360, %v139
        %v362 = vpop.permute.xlu0 %361
        %vm363 = vcmp.eq.s32.totalorder %v362, %v145
        %v364 = vsel %vm363, 1, 0
        %v365 = vcvt.s32.f32 %v364
        %v366 = vadd.f32 %v359, %v365
        %367 = vset.pattern.permute.xlu0 19
        %368 = vperm.xlu0 %367, %v139
        %v369 = vpop.permute.xlu0 %368
        %vm370 = vcmp.eq.s32.totalorder %v369, %v145
        %v371 = vsel %vm370, 1, 0
        %v372 = vcvt.s32.f32 %v371
        %v373 = vadd.f32 %v366, %v372
        %v375 = vsel %vm173, %v373, 0
        %377 = vmatpush.msra.mxu0 0.0
        %378 = vmatpush.msra.mxu0 0.0
        %379 = vmatpush.msra.mxu0 0.0
        %380 = vmatpush.msra.mxu0 0.0
        %381 = vmatpush.msra.mxu0 0.0
        %382 = vmatpush.msra.mxu0 0.0
        %383 = vmatpush.msra.mxu0 0.0
        %384 = vmatpush.msra.mxu0 0.0
        %385 = vmatpush.msra.mxu0 0.0
        %386 = vmatpush.msra.mxu0 0.0
        %387 = vmatpush.msra.mxu0 0.0
        %388 = vmatpush.msra.mxu0 0.0
        %389 = vmatpush.msra.mxu0 %v143
        %390 = vmatpush.msra.mxu0 %v142
        %391 = vmatpush.msra.mxu0 %v141
        %392 = vmatpush.msra.mxu0 %v140
        %393 = vmatmul.f32.gmra.mxu0 %v375
        %v394 = vpop.f32.mrf.mxu0
        %v395 = vadd.f32 0.0, %v394
        %396 = vdwg.mxu0
        %397 = vset.pattern.permute.xlu0 20
        %398 = vperm.xlu0 %397, %v139
        %v399 = vpop.permute.xlu0 %398
        %vm400 = vcmp.eq.s32.totalorder %v399, %v145
        %v401 = vsel %vm400, 1, 0
        %v402 = vcvt.s32.f32 %v401
        %403 = vset.pattern.permute.xlu0 21
        %404 = vperm.xlu0 %403, %v139
        %v405 = vpop.permute.xlu0 %404
        %vm406 = vcmp.eq.s32.totalorder %v405, %v145
        %v407 = vsel %vm406, 1, 0
        %v408 = vcvt.s32.f32 %v407
        %v409 = vadd.f32 %v402, %v408
        %410 = vset.pattern.permute.xlu0 22
        %411 = vperm.xlu0 %410, %v139
        %v412 = vpop.permute.xlu0 %411
        %vm413 = vcmp.eq.s32.totalorder %v412, %v145
        %v414 = vsel %vm413, 1, 0
        %v415 = vcvt.s32.f32 %v414
        %v416 = vadd.f32 %v409, %v415
        %417 = vset.pattern.permute.xlu0 23
        %418 = vperm.xlu0 %417, %v139
        %v419 = vpop.permute.xlu0 %418
        %vm420 = vcmp.eq.s32.totalorder %v419, %v145
        %v421 = vsel %vm420, 1, 0
        %v422 = vcvt.s32.f32 %v421
        %v423 = vadd.f32 %v416, %v422
        %v425 = vsel %vm173, %v423, 0
        %427 = vmatpush.msra.mxu0 0.0
        %428 = vmatpush.msra.mxu0 0.0
        %429 = vmatpush.msra.mxu0 0.0
        %430 = vmatpush.msra.mxu0 0.0
        %431 = vmatpush.msra.mxu0 0.0
        %432 = vmatpush.msra.mxu0 0.0
        %433 = vmatpush.msra.mxu0 0.0
        %434 = vmatpush.msra.mxu0 0.0
        %435 = vmatpush.msra.mxu0 0.0
        %436 = vmatpush.msra.mxu0 0.0
        %437 = vmatpush.msra.mxu0 0.0
        %438 = vmatpush.msra.mxu0 0.0
        %439 = vmatpush.msra.mxu0 %v143
        %440 = vmatpush.msra.mxu0 %v142
        %441 = vmatpush.msra.mxu0 %v141
        %442 = vmatpush.msra.mxu0 %v140
        %443 = vmatmul.f32.gmra.mxu0 %v425
        %v444 = vpop.f32.mrf.mxu0
        %v445 = vadd.f32 0.0, %v444
        %446 = vdwg.mxu0
        %447 = vset.pattern.permute.xlu0 24
        %448 = vperm.xlu0 %447, %v139
        %v449 = vpop.permute.xlu0 %448
        %vm450 = vcmp.eq.s32.totalorder %v449, %v145
        %v451 = vsel %vm450, 1, 0
        %v452 = vcvt.s32.f32 %v451
        %453 = vset.pattern.permute.xlu0 25
        %454 = vperm.xlu0 %453, %v139
        %v455 = vpop.permute.xlu0 %454
        %vm456 = vcmp.eq.s32.totalorder %v455, %v145
        %v457 = vsel %vm456, 1, 0
        %v458 = vcvt.s32.f32 %v457
        %v459 = vadd.f32 %v452, %v458
        %460 = vset.pattern.permute.xlu0 26
        %461 = vperm.xlu0 %460, %v139
        %v462 = vpop.permute.xlu0 %461
        %vm463 = vcmp.eq.s32.totalorder %v462, %v145
        %v464 = vsel %vm463, 1, 0
        %v465 = vcvt.s32.f32 %v464
        %v466 = vadd.f32 %v459, %v465
        %467 = vset.pattern.permute.xlu0 27
        %468 = vperm.xlu0 %467, %v139
        %v469 = vpop.permute.xlu0 %468
        %vm470 = vcmp.eq.s32.totalorder %v469, %v145
        %v471 = vsel %vm470, 1, 0
        %v472 = vcvt.s32.f32 %v471
        %v473 = vadd.f32 %v466, %v472
        %v475 = vsel %vm173, %v473, 0
        %477 = vmatpush.msra.mxu0 0.0
        %478 = vmatpush.msra.mxu0 0.0
        %479 = vmatpush.msra.mxu0 0.0
        %480 = vmatpush.msra.mxu0 0.0
        %481 = vmatpush.msra.mxu0 0.0
        %482 = vmatpush.msra.mxu0 0.0
        %483 = vmatpush.msra.mxu0 0.0
        %484 = vmatpush.msra.mxu0 0.0
        %485 = vmatpush.msra.mxu0 0.0
        %486 = vmatpush.msra.mxu0 0.0
        %487 = vmatpush.msra.mxu0 0.0
        %488 = vmatpush.msra.mxu0 0.0
        %489 = vmatpush.msra.mxu0 %v143
        %490 = vmatpush.msra.mxu0 %v142
        %491 = vmatpush.msra.mxu0 %v141
        %492 = vmatpush.msra.mxu0 %v140
        %493 = vmatmul.f32.gmra.mxu0 %v475
        %v494 = vpop.f32.mrf.mxu0
        %v495 = vadd.f32 0.0, %v494
        %496 = vdwg.mxu0
        %497 = vset.pattern.permute.xlu0 28
        %498 = vperm.xlu0 %497, %v139
        %v499 = vpop.permute.xlu0 %498
        %vm500 = vcmp.eq.s32.totalorder %v499, %v145
        %v501 = vsel %vm500, 1, 0
        %v502 = vcvt.s32.f32 %v501
        %503 = vset.pattern.permute.xlu0 29
        %504 = vperm.xlu0 %503, %v139
        %v505 = vpop.permute.xlu0 %504
        %vm506 = vcmp.eq.s32.totalorder %v505, %v145
        %v507 = vsel %vm506, 1, 0
        %v508 = vcvt.s32.f32 %v507
        %v509 = vadd.f32 %v502, %v508
        %510 = vset.pattern.permute.xlu0 30
        %511 = vperm.xlu0 %510, %v139
        %v512 = vpop.permute.xlu0 %511
        %vm513 = vcmp.eq.s32.totalorder %v512, %v145
        %v514 = vsel %vm513, 1, 0
        %v515 = vcvt.s32.f32 %v514
        %v516 = vadd.f32 %v509, %v515
        %517 = vset.pattern.permute.xlu0 31
        %518 = vperm.xlu0 %517, %v139
        %v519 = vpop.permute.xlu0 %518
        %vm520 = vcmp.eq.s32.totalorder %v519, %v145
        %v521 = vsel %vm520, 1, 0
        %v522 = vcvt.s32.f32 %v521
        %v523 = vadd.f32 %v516, %v522
        %v525 = vsel %vm173, %v523, 0
        %527 = vmatpush.msra.mxu0 0.0
        %528 = vmatpush.msra.mxu0 0.0
        %529 = vmatpush.msra.mxu0 0.0
        %530 = vmatpush.msra.mxu0 0.0
        %531 = vmatpush.msra.mxu0 0.0
        %532 = vmatpush.msra.mxu0 0.0
        %533 = vmatpush.msra.mxu0 0.0
        %534 = vmatpush.msra.mxu0 0.0
        %535 = vmatpush.msra.mxu0 0.0
        %536 = vmatpush.msra.mxu0 0.0
        %537 = vmatpush.msra.mxu0 0.0
        %538 = vmatpush.msra.mxu0 0.0
        %539 = vmatpush.msra.mxu0 %v143
        %540 = vmatpush.msra.mxu0 %v142
        %541 = vmatpush.msra.mxu0 %v141
        %542 = vmatpush.msra.mxu0 %v140
        %543 = vmatmul.f32.gmra.mxu0 %v525
        %v544 = vpop.f32.mrf.mxu0
        %v545 = vadd.f32 0.0, %v544
        %546 = vdwg.mxu0
        %547 = vset.pattern.permute.xlu0 32
        %548 = vperm.xlu0 %547, %v139
        %v549 = vpop.permute.xlu0 %548
        %vm550 = vcmp.eq.s32.totalorder %v549, %v145
        %v551 = vsel %vm550, 1, 0
        %v552 = vcvt.s32.f32 %v551
        %553 = vset.pattern.permute.xlu0 33
        %554 = vperm.xlu0 %553, %v139
        %v555 = vpop.permute.xlu0 %554
        %vm556 = vcmp.eq.s32.totalorder %v555, %v145
        %v557 = vsel %vm556, 1, 0
        %v558 = vcvt.s32.f32 %v557
        %v559 = vadd.f32 %v552, %v558
        %560 = vset.pattern.permute.xlu0 34
        %561 = vperm.xlu0 %560, %v139
        %v562 = vpop.permute.xlu0 %561
        %vm563 = vcmp.eq.s32.totalorder %v562, %v145
        %v564 = vsel %vm563, 1, 0
        %v565 = vcvt.s32.f32 %v564
        %v566 = vadd.f32 %v559, %v565
        %567 = vset.pattern.permute.xlu0 35
        %568 = vperm.xlu0 %567, %v139
        %v569 = vpop.permute.xlu0 %568
        %vm570 = vcmp.eq.s32.totalorder %v569, %v145
        %v571 = vsel %vm570, 1, 0
        %v572 = vcvt.s32.f32 %v571
        %v573 = vadd.f32 %v566, %v572
        %v575 = vsel %vm173, %v573, 0
        %577 = vmatpush.msra.mxu0 0.0
        %578 = vmatpush.msra.mxu0 0.0
        %579 = vmatpush.msra.mxu0 0.0
        %580 = vmatpush.msra.mxu0 0.0
        %581 = vmatpush.msra.mxu0 0.0
        %582 = vmatpush.msra.mxu0 0.0
        %583 = vmatpush.msra.mxu0 0.0
        %584 = vmatpush.msra.mxu0 0.0
        %585 = vmatpush.msra.mxu0 0.0
        %586 = vmatpush.msra.mxu0 0.0
        %587 = vmatpush.msra.mxu0 0.0
        %588 = vmatpush.msra.mxu0 0.0
        %589 = vmatpush.msra.mxu0 %v143
        %590 = vmatpush.msra.mxu0 %v142
        %591 = vmatpush.msra.mxu0 %v141
        %592 = vmatpush.msra.mxu0 %v140
        %593 = vmatmul.f32.gmra.mxu0 %v575
        %v594 = vpop.f32.mrf.mxu0
        %v595 = vadd.f32 0.0, %v594
        %596 = vdwg.mxu0
        %597 = vset.pattern.permute.xlu0 36
        %598 = vperm.xlu0 %597, %v139
        %v599 = vpop.permute.xlu0 %598
        %vm600 = vcmp.eq.s32.totalorder %v599, %v145
        %v601 = vsel %vm600, 1, 0
        %v602 = vcvt.s32.f32 %v601
        %603 = vset.pattern.permute.xlu0 37
        %604 = vperm.xlu0 %603, %v139
        %v605 = vpop.permute.xlu0 %604
        %vm606 = vcmp.eq.s32.totalorder %v605, %v145
        %v607 = vsel %vm606, 1, 0
        %v608 = vcvt.s32.f32 %v607
        %v609 = vadd.f32 %v602, %v608
        %610 = vset.pattern.permute.xlu0 38
        %611 = vperm.xlu0 %610, %v139
        %v612 = vpop.permute.xlu0 %611
        %vm613 = vcmp.eq.s32.totalorder %v612, %v145
        %v614 = vsel %vm613, 1, 0
        %v615 = vcvt.s32.f32 %v614
        %v616 = vadd.f32 %v609, %v615
        %617 = vset.pattern.permute.xlu0 39
        %618 = vperm.xlu0 %617, %v139
        %v619 = vpop.permute.xlu0 %618
        %vm620 = vcmp.eq.s32.totalorder %v619, %v145
        %v621 = vsel %vm620, 1, 0
        %v622 = vcvt.s32.f32 %v621
        %v623 = vadd.f32 %v616, %v622
        %v625 = vsel %vm173, %v623, 0
        %627 = vmatpush.msra.mxu0 0.0
        %628 = vmatpush.msra.mxu0 0.0
        %629 = vmatpush.msra.mxu0 0.0
        %630 = vmatpush.msra.mxu0 0.0
        %631 = vmatpush.msra.mxu0 0.0
        %632 = vmatpush.msra.mxu0 0.0
        %633 = vmatpush.msra.mxu0 0.0
        %634 = vmatpush.msra.mxu0 0.0
        %635 = vmatpush.msra.mxu0 0.0
        %636 = vmatpush.msra.mxu0 0.0
        %637 = vmatpush.msra.mxu0 0.0
        %638 = vmatpush.msra.mxu0 0.0
        %639 = vmatpush.msra.mxu0 %v143
        %640 = vmatpush.msra.mxu0 %v142
        %641 = vmatpush.msra.mxu0 %v141
        %642 = vmatpush.msra.mxu0 %v140
        %643 = vmatmul.f32.gmra.mxu0 %v625
        %v644 = vpop.f32.mrf.mxu0
        %v645 = vadd.f32 0.0, %v644
        %646 = vdwg.mxu0
        %647 = vset.pattern.permute.xlu0 40
        %648 = vperm.xlu0 %647, %v139
        %v649 = vpop.permute.xlu0 %648
        %vm650 = vcmp.eq.s32.totalorder %v649, %v145
        %v651 = vsel %vm650, 1, 0
        %v652 = vcvt.s32.f32 %v651
        %653 = vset.pattern.permute.xlu0 41
        %654 = vperm.xlu0 %653, %v139
        %v655 = vpop.permute.xlu0 %654
        %vm656 = vcmp.eq.s32.totalorder %v655, %v145
        %v657 = vsel %vm656, 1, 0
        %v658 = vcvt.s32.f32 %v657
        %v659 = vadd.f32 %v652, %v658
        %660 = vset.pattern.permute.xlu0 42
        %661 = vperm.xlu0 %660, %v139
        %v662 = vpop.permute.xlu0 %661
        %vm663 = vcmp.eq.s32.totalorder %v662, %v145
        %v664 = vsel %vm663, 1, 0
        %v665 = vcvt.s32.f32 %v664
        %v666 = vadd.f32 %v659, %v665
        %667 = vset.pattern.permute.xlu0 43
        %668 = vperm.xlu0 %667, %v139
        %v669 = vpop.permute.xlu0 %668
        %vm670 = vcmp.eq.s32.totalorder %v669, %v145
        %v671 = vsel %vm670, 1, 0
        %v672 = vcvt.s32.f32 %v671
        %v673 = vadd.f32 %v666, %v672
        %v675 = vsel %vm173, %v673, 0
        %677 = vmatpush.msra.mxu0 0.0
        %678 = vmatpush.msra.mxu0 0.0
        %679 = vmatpush.msra.mxu0 0.0
        %680 = vmatpush.msra.mxu0 0.0
        %681 = vmatpush.msra.mxu0 0.0
        %682 = vmatpush.msra.mxu0 0.0
        %683 = vmatpush.msra.mxu0 0.0
        %684 = vmatpush.msra.mxu0 0.0
        %685 = vmatpush.msra.mxu0 0.0
        %686 = vmatpush.msra.mxu0 0.0
        %687 = vmatpush.msra.mxu0 0.0
        %688 = vmatpush.msra.mxu0 0.0
        %689 = vmatpush.msra.mxu0 %v143
        %690 = vmatpush.msra.mxu0 %v142
        %691 = vmatpush.msra.mxu0 %v141
        %692 = vmatpush.msra.mxu0 %v140
        %693 = vmatmul.f32.gmra.mxu0 %v675
        %v694 = vpop.f32.mrf.mxu0
        %v695 = vadd.f32 0.0, %v694
        %696 = vdwg.mxu0
        %697 = vset.pattern.permute.xlu0 44
        %698 = vperm.xlu0 %697, %v139
        %v699 = vpop.permute.xlu0 %698
        %vm700 = vcmp.eq.s32.totalorder %v699, %v145
        %v701 = vsel %vm700, 1, 0
        %v702 = vcvt.s32.f32 %v701
        %703 = vset.pattern.permute.xlu0 45
        %704 = vperm.xlu0 %703, %v139
        %v705 = vpop.permute.xlu0 %704
        %vm706 = vcmp.eq.s32.totalorder %v705, %v145
        %v707 = vsel %vm706, 1, 0
        %v708 = vcvt.s32.f32 %v707
        %v709 = vadd.f32 %v702, %v708
        %710 = vset.pattern.permute.xlu0 46
        %711 = vperm.xlu0 %710, %v139
        %v712 = vpop.permute.xlu0 %711
        %vm713 = vcmp.eq.s32.totalorder %v712, %v145
        %v714 = vsel %vm713, 1, 0
        %v715 = vcvt.s32.f32 %v714
        %v716 = vadd.f32 %v709, %v715
        %717 = vset.pattern.permute.xlu0 47
        %718 = vperm.xlu0 %717, %v139
        %v719 = vpop.permute.xlu0 %718
        %vm720 = vcmp.eq.s32.totalorder %v719, %v145
        %v721 = vsel %vm720, 1, 0
        %v722 = vcvt.s32.f32 %v721
        %v723 = vadd.f32 %v716, %v722
        %v725 = vsel %vm173, %v723, 0
        %727 = vmatpush.msra.mxu0 0.0
        %728 = vmatpush.msra.mxu0 0.0
        %729 = vmatpush.msra.mxu0 0.0
        %730 = vmatpush.msra.mxu0 0.0
        %731 = vmatpush.msra.mxu0 0.0
        %732 = vmatpush.msra.mxu0 0.0
        %733 = vmatpush.msra.mxu0 0.0
        %734 = vmatpush.msra.mxu0 0.0
        %735 = vmatpush.msra.mxu0 0.0
        %736 = vmatpush.msra.mxu0 0.0
        %737 = vmatpush.msra.mxu0 0.0
        %738 = vmatpush.msra.mxu0 0.0
        %739 = vmatpush.msra.mxu0 %v143
        %740 = vmatpush.msra.mxu0 %v142
        %741 = vmatpush.msra.mxu0 %v141
        %742 = vmatpush.msra.mxu0 %v140
        %743 = vmatmul.f32.gmra.mxu0 %v725
        %v744 = vpop.f32.mrf.mxu0
        %v745 = vadd.f32 0.0, %v744
        %746 = vdwg.mxu0
        %747 = vset.pattern.permute.xlu0 48
        %748 = vperm.xlu0 %747, %v139
        %v749 = vpop.permute.xlu0 %748
        %vm750 = vcmp.eq.s32.totalorder %v749, %v145
        %v751 = vsel %vm750, 1, 0
        %v752 = vcvt.s32.f32 %v751
        %753 = vset.pattern.permute.xlu0 49
        %754 = vperm.xlu0 %753, %v139
        %v755 = vpop.permute.xlu0 %754
        %vm756 = vcmp.eq.s32.totalorder %v755, %v145
        %v757 = vsel %vm756, 1, 0
        %v758 = vcvt.s32.f32 %v757
        %v759 = vadd.f32 %v752, %v758
        %760 = vset.pattern.permute.xlu0 50
        %761 = vperm.xlu0 %760, %v139
        %v762 = vpop.permute.xlu0 %761
        %vm763 = vcmp.eq.s32.totalorder %v762, %v145
        %v764 = vsel %vm763, 1, 0
        %v765 = vcvt.s32.f32 %v764
        %v766 = vadd.f32 %v759, %v765
        %767 = vset.pattern.permute.xlu0 51
        %768 = vperm.xlu0 %767, %v139
        %v769 = vpop.permute.xlu0 %768
        %vm770 = vcmp.eq.s32.totalorder %v769, %v145
        %v771 = vsel %vm770, 1, 0
        %v772 = vcvt.s32.f32 %v771
        %v773 = vadd.f32 %v766, %v772
        %v775 = vsel %vm173, %v773, 0
        %777 = vmatpush.msra.mxu0 0.0
        %778 = vmatpush.msra.mxu0 0.0
        %779 = vmatpush.msra.mxu0 0.0
        %780 = vmatpush.msra.mxu0 0.0
        %781 = vmatpush.msra.mxu0 0.0
        %782 = vmatpush.msra.mxu0 0.0
        %783 = vmatpush.msra.mxu0 0.0
        %784 = vmatpush.msra.mxu0 0.0
        %785 = vmatpush.msra.mxu0 0.0
        %786 = vmatpush.msra.mxu0 0.0
        %787 = vmatpush.msra.mxu0 0.0
        %788 = vmatpush.msra.mxu0 0.0
        %789 = vmatpush.msra.mxu0 %v143
        %790 = vmatpush.msra.mxu0 %v142
        %791 = vmatpush.msra.mxu0 %v141
        %792 = vmatpush.msra.mxu0 %v140
        %793 = vmatmul.f32.gmra.mxu0 %v775
        %v794 = vpop.f32.mrf.mxu0
        %v795 = vadd.f32 0.0, %v794
        %796 = vdwg.mxu0
        %797 = vset.pattern.permute.xlu0 52
        %798 = vperm.xlu0 %797, %v139
        %v799 = vpop.permute.xlu0 %798
        %vm800 = vcmp.eq.s32.totalorder %v799, %v145
        %v801 = vsel %vm800, 1, 0
        %v802 = vcvt.s32.f32 %v801
        %803 = vset.pattern.permute.xlu0 53
        %804 = vperm.xlu0 %803, %v139
        %v805 = vpop.permute.xlu0 %804
        %vm806 = vcmp.eq.s32.totalorder %v805, %v145
        %v807 = vsel %vm806, 1, 0
        %v808 = vcvt.s32.f32 %v807
        %v809 = vadd.f32 %v802, %v808
        %810 = vset.pattern.permute.xlu0 54
        %811 = vperm.xlu0 %810, %v139
        %v812 = vpop.permute.xlu0 %811
        %vm813 = vcmp.eq.s32.totalorder %v812, %v145
        %v814 = vsel %vm813, 1, 0
        %v815 = vcvt.s32.f32 %v814
        %v816 = vadd.f32 %v809, %v815
        %817 = vset.pattern.permute.xlu0 55
        %818 = vperm.xlu0 %817, %v139
        %v819 = vpop.permute.xlu0 %818
        %vm820 = vcmp.eq.s32.totalorder %v819, %v145
        %v821 = vsel %vm820, 1, 0
        %v822 = vcvt.s32.f32 %v821
        %v823 = vadd.f32 %v816, %v822
        %v825 = vsel %vm173, %v823, 0
        %827 = vmatpush.msra.mxu0 0.0
        %828 = vmatpush.msra.mxu0 0.0
        %829 = vmatpush.msra.mxu0 0.0
        %830 = vmatpush.msra.mxu0 0.0
        %831 = vmatpush.msra.mxu0 0.0
        %832 = vmatpush.msra.mxu0 0.0
        %833 = vmatpush.msra.mxu0 0.0
        %834 = vmatpush.msra.mxu0 0.0
        %835 = vmatpush.msra.mxu0 0.0
        %836 = vmatpush.msra.mxu0 0.0
        %837 = vmatpush.msra.mxu0 0.0
        %838 = vmatpush.msra.mxu0 0.0
        %839 = vmatpush.msra.mxu0 %v143
        %840 = vmatpush.msra.mxu0 %v142
        %841 = vmatpush.msra.mxu0 %v141
        %842 = vmatpush.msra.mxu0 %v140
        %843 = vmatmul.f32.gmra.mxu0 %v825
        %v844 = vpop.f32.mrf.mxu0
        %v845 = vadd.f32 0.0, %v844
        %846 = vdwg.mxu0
        %847 = vset.pattern.permute.xlu0 56
        %848 = vperm.xlu0 %847, %v139
        %v849 = vpop.permute.xlu0 %848
        %vm850 = vcmp.eq.s32.totalorder %v849, %v145
        %v851 = vsel %vm850, 1, 0
        %v852 = vcvt.s32.f32 %v851
        %853 = vset.pattern.permute.xlu0 57
        %854 = vperm.xlu0 %853, %v139
        %v855 = vpop.permute.xlu0 %854
        %vm856 = vcmp.eq.s32.totalorder %v855, %v145
        %v857 = vsel %vm856, 1, 0
        %v858 = vcvt.s32.f32 %v857
        %v859 = vadd.f32 %v852, %v858
        %860 = vset.pattern.permute.xlu0 58
        %861 = vperm.xlu0 %860, %v139
        %v862 = vpop.permute.xlu0 %861
        %vm863 = vcmp.eq.s32.totalorder %v862, %v145
        %v864 = vsel %vm863, 1, 0
        %v865 = vcvt.s32.f32 %v864
        %v866 = vadd.f32 %v859, %v865
        %867 = vset.pattern.permute.xlu0 59
        %868 = vperm.xlu0 %867, %v139
        %v869 = vpop.permute.xlu0 %868
        %vm870 = vcmp.eq.s32.totalorder %v869, %v145
        %v871 = vsel %vm870, 1, 0
        %v872 = vcvt.s32.f32 %v871
        %v873 = vadd.f32 %v866, %v872
        %v875 = vsel %vm173, %v873, 0
        %877 = vmatpush.msra.mxu0 0.0
        %878 = vmatpush.msra.mxu0 0.0
        %879 = vmatpush.msra.mxu0 0.0
        %880 = vmatpush.msra.mxu0 0.0
        %881 = vmatpush.msra.mxu0 0.0
        %882 = vmatpush.msra.mxu0 0.0
        %883 = vmatpush.msra.mxu0 0.0
        %884 = vmatpush.msra.mxu0 0.0
        %885 = vmatpush.msra.mxu0 0.0
        %886 = vmatpush.msra.mxu0 0.0
        %887 = vmatpush.msra.mxu0 0.0
        %888 = vmatpush.msra.mxu0 0.0
        %889 = vmatpush.msra.mxu0 %v143
        %890 = vmatpush.msra.mxu0 %v142
        %891 = vmatpush.msra.mxu0 %v141
        %892 = vmatpush.msra.mxu0 %v140
        %893 = vmatmul.f32.gmra.mxu0 %v875
        %v894 = vpop.f32.mrf.mxu0
        %v895 = vadd.f32 0.0, %v894
        %896 = vdwg.mxu0
        %897 = vset.pattern.permute.xlu0 60
        %898 = vperm.xlu0 %897, %v139
        %v899 = vpop.permute.xlu0 %898
        %vm900 = vcmp.eq.s32.totalorder %v899, %v145
        %v901 = vsel %vm900, 1, 0
        %v902 = vcvt.s32.f32 %v901
        %903 = vset.pattern.permute.xlu0 61
        %904 = vperm.xlu0 %903, %v139
        %v905 = vpop.permute.xlu0 %904
        %vm906 = vcmp.eq.s32.totalorder %v905, %v145
        %v907 = vsel %vm906, 1, 0
        %v908 = vcvt.s32.f32 %v907
        %v909 = vadd.f32 %v902, %v908
        %910 = vset.pattern.permute.xlu0 62
        %911 = vperm.xlu0 %910, %v139
        %v912 = vpop.permute.xlu0 %911
        %vm913 = vcmp.eq.s32.totalorder %v912, %v145
        %v914 = vsel %vm913, 1, 0
        %v915 = vcvt.s32.f32 %v914
        %v916 = vadd.f32 %v909, %v915
        %917 = vset.pattern.permute.xlu0 63
        %918 = vperm.xlu0 %917, %v139
        %v919 = vpop.permute.xlu0 %918
        %vm920 = vcmp.eq.s32.totalorder %v919, %v145
        %v921 = vsel %vm920, 1, 0
        %v922 = vcvt.s32.f32 %v921
        %v923 = vadd.f32 %v916, %v922
        %v925 = vsel %vm173, %v923, 0
        %927 = vmatpush.msra.mxu0 0.0
        %928 = vmatpush.msra.mxu0 0.0
        %929 = vmatpush.msra.mxu0 0.0
        %930 = vmatpush.msra.mxu0 0.0
        %931 = vmatpush.msra.mxu0 0.0
        %932 = vmatpush.msra.mxu0 0.0
        %933 = vmatpush.msra.mxu0 0.0
        %934 = vmatpush.msra.mxu0 0.0
        %935 = vmatpush.msra.mxu0 0.0
        %936 = vmatpush.msra.mxu0 0.0
        %937 = vmatpush.msra.mxu0 0.0
        %938 = vmatpush.msra.mxu0 0.0
        %939 = vmatpush.msra.mxu0 %v143
        %940 = vmatpush.msra.mxu0 %v142
        %941 = vmatpush.msra.mxu0 %v141
        %942 = vmatpush.msra.mxu0 %v140
        %943 = vmatmul.f32.gmra.mxu0 %v925
        %v944 = vpop.f32.mrf.mxu0
        %v945 = vadd.f32 0.0, %v944
        %946 = vdwg.mxu0
        %948 = vrot.lane.b32.xlu0 %v245, 8
        %v949 = vpop.permute.xlu0 %948
        %952 = vrot.lane.b32.xlu0 %v295, 16
        %v953 = vpop.permute.xlu0 %952
        %956 = vrot.lane.b32.xlu0 %v345, 24
        %v957 = vpop.permute.xlu0 %956
        %960 = vrot.lane.b32.xlu0 %v395, 32
        %v961 = vpop.permute.xlu0 %960
        %964 = vrot.lane.b32.xlu0 %v445, 40
        %v965 = vpop.permute.xlu0 %964
        %968 = vrot.lane.b32.xlu0 %v495, 48
        %v969 = vpop.permute.xlu0 %968
        %972 = vrot.lane.b32.xlu0 %v545, 56
        %v973 = vpop.permute.xlu0 %972
        %976 = vrot.lane.b32.xlu0 %v595, 64
        %v977 = vpop.permute.xlu0 %976
        %980 = vrot.lane.b32.xlu0 %v645, 72
        %v981 = vpop.permute.xlu0 %980
        %984 = vrot.lane.b32.xlu0 %v695, 80
        %v985 = vpop.permute.xlu0 %984
        %988 = vrot.lane.b32.xlu0 %v745, 88
        %v989 = vpop.permute.xlu0 %988
        %992 = vrot.lane.b32.xlu0 %v795, 96
        %v993 = vpop.permute.xlu0 %992
        %996 = vrot.lane.b32.xlu0 %v845, 104
        %v997 = vpop.permute.xlu0 %996
        %1000 = vrot.lane.b32.xlu0 %v895, 112
        %v1001 = vpop.permute.xlu0 %1000
        %1004 = vrot.lane.b32.xlu0 %v945, 120
        %v1005 = vpop.permute.xlu0 %1004
        %vm1007 = vcmask 64512
        %v1008 = vsel %vm1007, %v195, %v949
        %vm1009 = vcmask 130048
        %v1010 = vsel %vm1009, %v1008, %v953
        %vm1011 = vcmask 195584
        %v1012 = vsel %vm1011, %v1010, %v957
        %v1013 = vsel %vm173, %v1012, %v961
        %vm1014 = vcmask 326656
        %v1015 = vsel %vm1014, %v1013, %v965
        %vm1016 = vcmask 392192
        %v1017 = vsel %vm1016, %v1015, %v969
        %vm1018 = vcmask 457728
        %v1019 = vsel %vm1018, %v1017, %v973
        %vm1020 = vcmask 523264
        %v1021 = vsel %vm1020, %v1019, %v977
        %vm1022 = vcmask 588800
        %v1023 = vsel %vm1022, %v1021, %v981
        %vm1024 = vcmask 654336
        %v1025 = vsel %vm1024, %v1023, %v985
        %vm1026 = vcmask 719872
        %v1027 = vsel %vm1026, %v1025, %v989
        %vm1028 = vcmask 785408
        %v1029 = vsel %vm1028, %v1027, %v993
        %vm1030 = vcmask 850944
        %v1031 = vsel %vm1030, %v1029, %v997
        %vm1032 = vcmask 916480
        %v1033 = vsel %vm1032, %v1031, %v1001
        %vm1034 = vcmask 982016
        %v1035 = vsel %vm1034, %v1033, %v1005
        %1036 = vst [vmem:[%s134] sm:$0xff] %v1035
        %s1037 = sand.u32 %s71, 1
        %s1038 = scalar_lea.sflag [#allocation3], %s1037
        %s1039 = sand.u32 %s71, 1
        %s1040 = smul.addr %s1039, 8
        %s1041 = scalar_lea.vmem [#allocation2], %s1040
        // Predicated region
        $region29: #{tpu_custom_call.1} parent=27 // pred_check
          %p1042 = pneg %p81
        $region30: #{tpu_custom_call.1} parent=27 // pred_check_branch
          %1044 = sbr.rel (%p1042) target = $region32
        $region31: #{tpu_custom_call.1} parent=27 // pred_region
          %1046 = vsyncadd %s1038, 0
          %s1047 = smul.addr %s16, 8
          %s1048 = scalar_lea.hbm %s2, %s1047
          %s1050 = sshll.u32 %s1041, 4
          %s1051 = int_to_ptr.vmem [resolvable:$true] %s1050
          %s1052 = sshll.u32 %s1048, 4
          %s1053 = int_to_ptr.hbm [resolvable:$true] %s1052
          %1055 = dma.vmem_to_hbm [thread:$0]  %s1051, 128, %s1053, %s1038
        $region32: #{tpu_custom_call.1} parent=27 // pred_fallthru
          _
      $region28: #{tpu_custom_call.1} parent=5 // pred_fallthru
        _
      %p1056 = scmp.le.s32.totalorder 2, %s11
      // Predicated region
      $region33: #{tpu_custom_call.1} parent=5 // pred_check
        %p1057 = pneg %p1056
      $region34: #{tpu_custom_call.1} parent=5 // pred_check_branch
        %1059 = sbr.rel (%p1057) target = $region36
      $region35: #{tpu_custom_call.1} parent=5 // pred_region
        %s1060 = ssub.s32 %s11, 2
        // Predicated region
        $region37: #{tpu_custom_call.1} parent=35 // pred_check
          %p1061 = pneg %p87
        $region38: #{tpu_custom_call.1} parent=35 // pred_check_branch
          %1063 = sbr.rel (%p1061) target = $region40
        $region39: #{tpu_custom_call.1} parent=35 // pred_region
          %s1064 = sand.u32 %s72, 1
          %s1065 = scalar_lea.sflag [#allocation3], %s1064
          %s1066 = sand.u32 %s72, 1
          %s1067 = smul.addr %s1066, 8
          %s1068 = scalar_lea.vmem [#allocation2], %s1067
          %1070 = dma.done %s1065, 128
        $region40: #{tpu_custom_call.1} parent=35 // pred_fallthru
          _
      $region36: #{tpu_custom_call.1} parent=5 // pred_fallthru
        _
    $region6: #{tpu_custom_call.1} parent=1 // loop_footer
      %s15 = sadd.s32 1, %s11
    $region7: #{tpu_custom_call.1} parent=1 // loop_footer_branch
      %10 = sbr.rel target = $region3
    $region8: #{tpu_custom_call.1} parent=1 // loop_exit
      _
    %1071 = vsyncpa [#allocation3], 1
    %s1072 = scalar_lea.sflag [#allocation3], 1
    %1073 = vsyncpa %s1072, 1

</llo_original>
